<compile_context>
chip_gen: v7x
topology: tpu7x:2x2x1
jax: 0.10.0
libtpu: 0.0.40
codegen_flags: <defaults>
</compile_context>

<pallas_src>
import functools

import numpy as np
import jax
import jax.numpy as jnp
from jax import lax
from jax.experimental import pallas as pl
from jax.experimental.pallas import tpu as pltpu

# ---------------- static config ----------------
HIDDEN = 32          # args.hidden_size
LIDAR = 8            # args.lidar_map_size
VIS_SEQ = 4          # args.vis_seq
EGO = 8              # args.ego_vec_size
OTHER = 16           # args.other_vec_size (== 2*EGO because of .repeat(1, 2))
VIS_C = 1            # vis channels (uncertainty_type == 'none')
RECURRENT_N = 1      # args.recurrent_N
B = 2
EPS = 1e-5           # nn.LayerNorm default eps

S = LIDAR * LIDAR                     # 64 spatial positions per frame
VIS_LEN = VIS_SEQ * VIS_C * S         # 256
VEC_DIM = EGO + OTHER                 # 24
OBS_DIM = VIS_LEN + VIS_SEQ * VEC_DIM  # 352
RNN_IN = 2 * HIDDEN + S               # 128 (critic_features dim)


# ---------------------------------------------------------------------------
# The single fused kernel.
# ---------------------------------------------------------------------------
def r_critic_kernel(obs_ref, rnn_ref, mask_ref,
                    kconv_ref, bconv_ref,
                    fng_ref, fnb_ref, w1_ref, b1_ref, g1_ref, be1_ref,
                    w2_ref, b2_ref, g2_ref, be2_ref,
                    wg_ref, bg_ref, lng_ref, lnb_ref, wv_ref, bv_ref,
                    val_ref, hout_ref):
    f32 = jnp.float32
    Bb = obs_ref.shape[0]

    def ln_groups(v, gamma, beta, splits):
        # LayerNorm applied independently to consecutive lane groups of v, then one
        # fused affine with the concatenated (1, sum(splits)) gamma/beta.
        outs, s = [], 0
        for d in splits:
            seg = v[:, s:s + d]
            mu = jnp.mean(seg, axis=-1, keepdims=True)
            var = jnp.mean((seg - mu) ** 2, axis=-1, keepdims=True)
            outs.append((seg - mu) * lax.rsqrt(var + EPS))
            s += d
        y = outs[0] if len(outs) == 1 else jnp.concatenate(outs, axis=-1)
        return y * gamma + beta

    obs = obs_ref[...]                                   # (B, 352), lane-dense

    # ---- ConvLSTM over the vis sequence (im2col matmul on MXU), time-mean of h ----
    kconv = kconv_ref[...]                               # (2S, 4S) packed conv weights
    bconv = bconv_ref[...]                               # (1, 4S) packed conv bias
    h = jnp.zeros((Bb, S), f32)
    c = jnp.zeros((Bb, S), f32)
    acc = jnp.zeros((Bb, S), f32)
    for t in range(VIS_SEQ):                             # T=4, fully unrolled in-body
        x_t = obs[:, t * S:(t + 1) * S]                  # frame t, already row-major (B, 64)
        xh = jnp.concatenate([x_t, h], axis=-1)          # (B, 128)
        gates = jnp.dot(xh, kconv, preferred_element_type=f32) + bconv   # (B, 256)
        gi = jax.nn.sigmoid(gates[:, 0 * S:1 * S])       # gate order i, f, o, g
        gf = jax.nn.sigmoid(gates[:, 1 * S:2 * S])
        go = jax.nn.sigmoid(gates[:, 2 * S:3 * S])
        gg = jnp.tanh(gates[:, 3 * S:4 * S])
        c = gf * c + gi * gg
        h = go * jnp.tanh(c)
        acc = acc + h
    vis_x = acc * (1.0 / VIS_SEQ)                        # == conv_lstm_output[0].mean(dim=1)

    # ---- ego / relative-other MLP bases (block-diagonal fused) ----
    base = VIS_LEN + (VIS_SEQ - 1) * VEC_DIM             # last vec timestep offset (328)
    ego = obs[:, base:base + EGO]                        # (B, 8)
    other = obs[:, base + EGO:base + EGO + OTHER]        # (B, 16)
    rel = other - jnp.concatenate([ego, ego], axis=-1)   # other - ego.repeat(1, 2)

    v0 = ln_groups(jnp.concatenate([ego, rel], axis=-1),
                   fng_ref[...], fnb_ref[...], (EGO, OTHER))                 # (B, 24)
    h1 = jnp.maximum(jnp.dot(v0, w1_ref[...], preferred_element_type=f32)
                     + b1_ref[...], 0.0)                                     # (B, 64)
    h1 = ln_groups(h1, g1_ref[...], be1_ref[...], (HIDDEN, HIDDEN))
    h2 = jnp.maximum(jnp.dot(h1, w2_ref[...], preferred_element_type=f32)
                     + b2_ref[...], 0.0)                                     # (B, 64)
    vec_x = ln_groups(h2, g2_ref[...], be2_ref[...], (HIDDEN, HIDDEN))       # [ego_x | other_x]

    # ---- masked single-step GRU (PyTorch r|z|n) + LayerNorm + value head ----
    h0 = rnn_ref[:, 0, :] * mask_ref[...]                # recurrent_N = 1, mask the hidden
    feats = jnp.concatenate([vis_x, vec_x], axis=-1)     # (B, 128) critic_features
    xh_g = jnp.concatenate([feats, h0], axis=-1)         # (B, 160)
    G = jnp.dot(xh_g, wg_ref[...], preferred_element_type=f32) + bg_ref[...]  # (B, 128)
    r = jax.nn.sigmoid(G[:, 0:HIDDEN])
    z = jax.nn.sigmoid(G[:, HIDDEN:2 * HIDDEN])
    n = jnp.tanh(G[:, 2 * HIDDEN:3 * HIDDEN] + r * G[:, 3 * HIDDEN:4 * HIDDEN])
    h_new = (1.0 - z) * n + z * h0
    hout_ref[:, 0, :] = h_new                            # returned rnn_states (pre-norm)

    y = ln_groups(h_new, lng_ref[...], lnb_ref[...], (HIDDEN,))
    val_ref[...] = jnp.dot(y, wv_ref[...], preferred_element_type=f32) + bv_ref[...]


# ---------------------------------------------------------------------------
# Wrapper: one pallas_call, no grid, everything VMEM-resident.
# ---------------------------------------------------------------------------
def r_critic_forward(packed, cent_obs, rnn_states, masks):
    Bb = cent_obs.shape[0]
    args = (cent_obs, rnn_states, masks,
            packed["k_conv"], packed["b_conv"],
            packed["fn_g"], packed["fn_b"], packed["w1"], packed["b1"],
            packed["g1"], packed["be1"], packed["w2"], packed["b2"],
            packed["g2"], packed["be2"],
            packed["gru_w"], packed["gru_b"], packed["ln_g"], packed["ln_b"],
            packed["v_w"], packed["v_b"])

    flops = 2 * Bb * (VIS_SEQ * (2 * S) * (4 * S)         # ConvLSTM matmuls
                      + VEC_DIM * 2 * HIDDEN + (2 * HIDDEN) ** 2   # MLP matmuls
                      + (RNN_IN + HIDDEN) * 4 * HIDDEN + HIDDEN)   # GRU + v_out
    transcendentals = Bb * (VIS_SEQ * 5 * S + 4 * HIDDEN)
    bytes_accessed = (sum(int(np.prod(a.shape)) for a in args)
                      + Bb * (1 + RECURRENT_N * HIDDEN)) * 4

    values, h_new = pl.pallas_call(
        r_critic_kernel,
        out_shape=(jax.ShapeDtypeStruct((Bb, 1), jnp.float32),
                   jax.ShapeDtypeStruct((Bb, RECURRENT_N, HIDDEN), jnp.float32)),
        in_specs=[pl.BlockSpec(memory_space=pltpu.MemorySpace.VMEM)] * len(args),
        out_specs=(pl.BlockSpec(memory_space=pltpu.MemorySpace.VMEM),
                   pl.BlockSpec(memory_space=pltpu.MemorySpace.VMEM)),
        input_output_aliases={1: 1},      # rnn_states buffer reused for new rnn_states
        cost_estimate=pl.CostEstimate(flops=flops, transcendentals=transcendentals,
                                      bytes_accessed=bytes_accessed),
    )(*args)
    return values, h_new


# ---------------------------------------------------------------------------
# Parameter construction: raw "PyTorch-layout" params + one-time repacking.
# ---------------------------------------------------------------------------
def _nrm(key, shape, scale=0.1):
    return scale * jax.random.normal(key, shape, jnp.float32)


def make_mlp_params(key, d_in, d_h):
    k1, k2 = jax.random.split(key)
    return dict(
        fn_g=jnp.ones((d_in,), jnp.float32), fn_b=jnp.zeros((d_in,), jnp.float32),
        w1=_nrm(k1, (d_in, d_h)), b1=jnp.zeros((d_h,), jnp.float32),
        g1=jnp.ones((d_h,), jnp.float32), be1=jnp.zeros((d_h,), jnp.float32),
        w2=_nrm(k2, (d_h, d_h)), b2=jnp.zeros((d_h,), jnp.float32),
        g2=jnp.ones((d_h,), jnp.float32), be2=jnp.zeros((d_h,), jnp.float32),
    )


def pack_conv(wx, wh, b):
    """Pack the ConvLSTMCell 3x3 'same' conv (in=1+1 channels, hidden=1, 4 gates i,f,o,g)
    into an im2col matrix K (2S, 4S) and bias (1, 4S), so that for row-major flattened
    frames: concat([x_flat, h_flat], -1) @ K + bias == conv([x|h]) flattened per gate."""
    wx, wh, b = np.asarray(wx), np.asarray(wh), np.asarray(b)
    K = np.zeros((2 * S, 4 * S), np.float32)
    for g in range(4):
        for oi in range(LIDAR):
            for oj in range(LIDAR):
                q = g * S + oi * LIDAR + oj
                for dy in range(3):
                    for dx in range(3):
                        ii, jj = oi + dy - 1, oj + dx - 1
                        if 0 <= ii < LIDAR and 0 <= jj < LIDAR:
                            p = ii * LIDAR + jj
                            K[p, q] = wx[g, dy, dx]
                            K[S + p, q] = wh[g, dy, dx]
    bias = np.repeat(b.astype(np.float32), S)[None, :]
    return jnp.asarray(K), jnp.asarray(bias)


def pack_mlps(ego_p, oth_p):
    """Merge ego_vec_base and other_vec_base into block-diagonal weights so the two
    MLPBase stacks run as one pair of matmuls (LayerNorm stats stay per-branch)."""
    def blockdiag(a, c):
        a, c = np.asarray(a), np.asarray(c)
        m = np.zeros((a.shape[0] + c.shape[0], a.shape[1] + c.shape[1]), np.float32)
        m[:a.shape[0], :a.shape[1]] = a
        m[a.shape[0]:, a.shape[1]:] = c
        return jnp.asarray(m)

    def cat(a, c):
        return jnp.asarray(np.concatenate([np.asarray(a), np.asarray(c)])[None, :])

    return dict(
        fn_g=cat(ego_p["fn_g"], oth_p["fn_g"]), fn_b=cat(ego_p["fn_b"], oth_p["fn_b"]),
        w1=blockdiag(ego_p["w1"], oth_p["w1"]), b1=cat(ego_p["b1"], oth_p["b1"]),
        g1=cat(ego_p["g1"], oth_p["g1"]), be1=cat(ego_p["be1"], oth_p["be1"]),
        w2=blockdiag(ego_p["w2"], oth_p["w2"]), b2=cat(ego_p["b2"], oth_p["b2"]),
        g2=cat(ego_p["g2"], oth_p["g2"]), be2=cat(ego_p["be2"], oth_p["be2"]),
    )


def pack_gru(wi, wh, bi, bh):
    """wi: (RNN_IN, 3H), wh: (H, 3H) with PyTorch gate order r|z|n (already transposed
    to (in, out)); biases (3H,). Pack into W (RNN_IN+H, 4H), b (1, 4H) with column
    layout [r | z | n_x | n_h] so the n-gate hidden term stays separate (needed for
    n = tanh(gi_n + bi_n + r * (gh_n + bh_n)))."""
    H = HIDDEN
    wi, wh = np.asarray(wi), np.asarray(wh)
    bi, bh = np.asarray(bi), np.asarray(bh)
    W = np.zeros((RNN_IN + H, 4 * H), np.float32)
    W[:RNN_IN, 0:H] = wi[:, 0:H]
    W[:RNN_IN, H:2 * H] = wi[:, H:2 * H]
    W[:RNN_IN, 2 * H:3 * H] = wi[:, 2 * H:3 * H]
    W[RNN_IN:, 0:H] = wh[:, 0:H]
    W[RNN_IN:, H:2 * H] = wh[:, H:2 * H]
    W[RNN_IN:, 3 * H:4 * H] = wh[:, 2 * H:3 * H]
    bpk = np.zeros((1, 4 * H), np.float32)
    bpk[0, 0:H] = bi[0:H] + bh[0:H]
    bpk[0, H:2 * H] = bi[H:2 * H] + bh[H:2 * H]
    bpk[0, 2 * H:3 * H] = bi[2 * H:3 * H]
    bpk[0, 3 * H:4 * H] = bh[2 * H:3 * H]
    return jnp.asarray(W), jnp.asarray(bpk)


def init_params(key):
    ks = jax.random.split(key, 8)
    # Raw PyTorch-shaped parameters (biases zero, matching the module's init_()).
    clstm_wx = _nrm(ks[0], (4, 3, 3))                    # per-gate 3x3 kernels, in ch = 1
    clstm_wh = _nrm(ks[1], (4, 3, 3))                    # per-gate 3x3 kernels, hid ch = 1
    clstm_b = jnp.zeros((4,), jnp.float32)
    ego_mlp = make_mlp_params(ks[2], EGO, HIDDEN)
    oth_mlp = make_mlp_params(ks[3], OTHER, HIDDEN)
    gru_wi = _nrm(ks[4], (RNN_IN, 3 * HIDDEN))           # gate order r|z|n
    gru_wh = _nrm(ks[5], (HIDDEN, 3 * HIDDEN))
    gru_bi = jnp.zeros((3 * HIDDEN,), jnp.float32)
    gru_bh = jnp.zeros((3 * HIDDEN,), jnp.float32)

    k_conv, b_conv = pack_conv(clstm_wx, clstm_wh, clstm_b)
    gru_w, gru_b = pack_gru(gru_wi, gru_wh, gru_bi, gru_bh)
    packed = dict(
        k_conv=k_conv, b_conv=b_conv,
        gru_w=gru_w, gru_b=gru_b,
        ln_g=jnp.ones((1, HIDDEN), jnp.float32), ln_b=jnp.zeros((1, HIDDEN), jnp.float32),
        v_w=_nrm(ks[6], (HIDDEN, 1)), v_b=jnp.zeros((1, 1), jnp.float32),
        **pack_mlps(ego_mlp, oth_mlp),
    )
    return packed
    # TODO(synk): PopArt head (use_popart=True branch) not implemented; plain Linear v_out used.


if __name__ == "__main__":
    key = jax.random.PRNGKey(0)
    k_obs, k_h, k_p = jax.random.split(key, 3)

    cent_obs = jax.random.normal(k_obs, (B, OBS_DIM), jnp.float32)          # (2, 352)
    rnn_states = jax.random.normal(k_h, (B, RECURRENT_N, HIDDEN), jnp.float32)
    masks = jnp.ones((B, 1), jnp.float32)

    params = init_params(k_p)

    fwd = jax.jit(functools.partial(r_critic_forward, params))
    values, new_rnn_states = fwd(cent_obs, rnn_states, masks)
    jax.block_until_ready((values, new_rnn_states))

    assert values.shape == (B, 1)
    assert new_rnn_states.shape == (B, RECURRENT_N, HIDDEN)
    assert bool(jnp.all(jnp.isfinite(values))) and bool(jnp.all(jnp.isfinite(new_rnn_states)))
    print("KERNEL_OK")
</pallas_src>

<mosaic_0001>
module attributes {stable_mosaic.version = 11 : i64} {
  func.func @r_critic_kernel(%arg0: memref<2x352xf32, #tpu.memory_space<vmem>>, %arg1: memref<2x1x32xf32, #tpu.memory_space<vmem>>, %arg2: memref<2x1xf32, #tpu.memory_space<vmem>>, %arg3: memref<128x256xf32, #tpu.memory_space<vmem>>, %arg4: memref<1x256xf32, #tpu.memory_space<vmem>>, %arg5: memref<1x24xf32, #tpu.memory_space<vmem>>, %arg6: memref<1x24xf32, #tpu.memory_space<vmem>>, %arg7: memref<24x64xf32, #tpu.memory_space<vmem>>, %arg8: memref<1x64xf32, #tpu.memory_space<vmem>>, %arg9: memref<1x64xf32, #tpu.memory_space<vmem>>, %arg10: memref<1x64xf32, #tpu.memory_space<vmem>>, %arg11: memref<64x64xf32, #tpu.memory_space<vmem>>, %arg12: memref<1x64xf32, #tpu.memory_space<vmem>>, %arg13: memref<1x64xf32, #tpu.memory_space<vmem>>, %arg14: memref<1x64xf32, #tpu.memory_space<vmem>>, %arg15: memref<160x128xf32, #tpu.memory_space<vmem>>, %arg16: memref<1x128xf32, #tpu.memory_space<vmem>>, %arg17: memref<1x32xf32, #tpu.memory_space<vmem>>, %arg18: memref<1x32xf32, #tpu.memory_space<vmem>>, %arg19: memref<32x1xf32, #tpu.memory_space<vmem>>, %arg20: memref<1x1xf32, #tpu.memory_space<vmem>>, %arg21: memref<2x1xf32, #tpu.memory_space<vmem>>, %arg22: memref<2x1x32xf32, #tpu.memory_space<vmem>>) attributes {dimension_semantics = [], scalar_prefetch = 0 : i64, scratch_operands = 0 : i64, tpu.core_type = #tpu.core_type<tc>} {
    %c0 = arith.constant 0 : index
    %c0_0 = arith.constant 0 : index
    %0 = vector.load %arg0[%c0, %c0_0] : memref<2x352xf32, #tpu.memory_space<vmem>>, vector<2x352xf32>
    %c0_1 = arith.constant 0 : index
    %c0_2 = arith.constant 0 : index
    %1 = vector.load %arg3[%c0_1, %c0_2] : memref<128x256xf32, #tpu.memory_space<vmem>>, vector<128x256xf32>
    %c0_3 = arith.constant 0 : index
    %c0_4 = arith.constant 0 : index
    %2 = vector.load %arg4[%c0_3, %c0_4] : memref<1x256xf32, #tpu.memory_space<vmem>>, vector<1x256xf32>
    %cst = arith.constant 0.000000e+00 : f32
    %3 = vector.broadcast %cst : f32 to vector<2x64xf32>
    %cst_5 = arith.constant 0.000000e+00 : f32
    %4 = vector.broadcast %cst_5 : f32 to vector<2x64xf32>
    %cst_6 = arith.constant 0.000000e+00 : f32
    %5 = vector.broadcast %cst_6 : f32 to vector<2x64xf32>
    %6 = vector.extract_strided_slice %0 {offsets = [0, 0], sizes = [2, 64], strides = [1, 1]} : vector<2x352xf32> to vector<2x64xf32>
    %7 = tpu.concatenate %6, %3 in 1 : vector<2x64xf32>, vector<2x64xf32> -> vector<2x128xf32>
    %cst_7 = arith.constant dense<0.000000e+00> : vector<2x256xf32>
    %8 = tpu.matmul %7, %1, %cst_7 {dimension_numbers = #tpu.dot_dimension_numbers<[1], [0], [0], [1], [0, 0, 1, 1], [], []>} : vector<2x128xf32>, vector<128x256xf32>, vector<2x256xf32> -> vector<2x256xf32>
    %9 = vector.broadcast %2 : vector<1x256xf32> to vector<2x256xf32>
    %10 = arith.addf %8, %9 : vector<2x256xf32>
    %11 = vector.extract_strided_slice %10 {offsets = [0, 0], sizes = [2, 64], strides = [1, 1]} : vector<2x256xf32> to vector<2x64xf32>
    %12 = arith.negf %11 : vector<2x64xf32>
    %13 = math.exp %12 : vector<2x64xf32>
    %cst_8 = arith.constant 1.000000e+00 : f32
    %14 = vector.broadcast %cst_8 : f32 to vector<2x64xf32>
    %15 = arith.addf %14, %13 : vector<2x64xf32>
    %16 = arith.divf %14, %15 : vector<2x64xf32>
    %17 = vector.extract_strided_slice %10 {offsets = [0, 64], sizes = [2, 64], strides = [1, 1]} : vector<2x256xf32> to vector<2x64xf32>
    %18 = arith.negf %17 : vector<2x64xf32>
    %19 = math.exp %18 : vector<2x64xf32>
    %cst_9 = arith.constant 1.000000e+00 : f32
    %20 = vector.broadcast %cst_9 : f32 to vector<2x64xf32>
    %21 = arith.addf %20, %19 : vector<2x64xf32>
    %22 = arith.divf %20, %21 : vector<2x64xf32>
    %23 = vector.extract_strided_slice %10 {offsets = [0, 128], sizes = [2, 64], strides = [1, 1]} : vector<2x256xf32> to vector<2x64xf32>
    %24 = arith.negf %23 : vector<2x64xf32>
    %25 = math.exp %24 : vector<2x64xf32>
    %cst_10 = arith.constant 1.000000e+00 : f32
    %26 = vector.broadcast %cst_10 : f32 to vector<2x64xf32>
    %27 = arith.addf %26, %25 : vector<2x64xf32>
    %28 = arith.divf %26, %27 : vector<2x64xf32>
    %29 = vector.extract_strided_slice %10 {offsets = [0, 192], sizes = [2, 64], strides = [1, 1]} : vector<2x256xf32> to vector<2x64xf32>
    %30 = math.tanh %29 : vector<2x64xf32>
    %31 = arith.mulf %22, %4 : vector<2x64xf32>
    %32 = arith.mulf %16, %30 : vector<2x64xf32>
    %33 = arith.addf %31, %32 : vector<2x64xf32>
    %34 = math.tanh %33 : vector<2x64xf32>
    %35 = arith.mulf %28, %34 : vector<2x64xf32>
    %36 = arith.addf %5, %35 : vector<2x64xf32>
    %37 = vector.extract_strided_slice %0 {offsets = [0, 64], sizes = [2, 64], strides = [1, 1]} : vector<2x352xf32> to vector<2x64xf32>
    %38 = tpu.concatenate %37, %35 in 1 : vector<2x64xf32>, vector<2x64xf32> -> vector<2x128xf32>
    %cst_11 = arith.constant dense<0.000000e+00> : vector<2x256xf32>
    %39 = tpu.matmul %38, %1, %cst_11 {dimension_numbers = #tpu.dot_dimension_numbers<[1], [0], [0], [1], [0, 0, 1, 1], [], []>} : vector<2x128xf32>, vector<128x256xf32>, vector<2x256xf32> -> vector<2x256xf32>
    %40 = vector.broadcast %2 : vector<1x256xf32> to vector<2x256xf32>
    %41 = arith.addf %39, %40 : vector<2x256xf32>
    %42 = vector.extract_strided_slice %41 {offsets = [0, 0], sizes = [2, 64], strides = [1, 1]} : vector<2x256xf32> to vector<2x64xf32>
    %43 = arith.negf %42 : vector<2x64xf32>
    %44 = math.exp %43 : vector<2x64xf32>
    %cst_12 = arith.constant 1.000000e+00 : f32
    %45 = vector.broadcast %cst_12 : f32 to vector<2x64xf32>
    %46 = arith.addf %45, %44 : vector<2x64xf32>
    %47 = arith.divf %45, %46 : vector<2x64xf32>
    %48 = vector.extract_strided_slice %41 {offsets = [0, 64], sizes = [2, 64], strides = [1, 1]} : vector<2x256xf32> to vector<2x64xf32>
    %49 = arith.negf %48 : vector<2x64xf32>
    %50 = math.exp %49 : vector<2x64xf32>
    %cst_13 = arith.constant 1.000000e+00 : f32
    %51 = vector.broadcast %cst_13 : f32 to vector<2x64xf32>
    %52 = arith.addf %51, %50 : vector<2x64xf32>
    %53 = arith.divf %51, %52 : vector<2x64xf32>
    %54 = vector.extract_strided_slice %41 {offsets = [0, 128], sizes = [2, 64], strides = [1, 1]} : vector<2x256xf32> to vector<2x64xf32>
    %55 = arith.negf %54 : vector<2x64xf32>
    %56 = math.exp %55 : vector<2x64xf32>
    %cst_14 = arith.constant 1.000000e+00 : f32
    %57 = vector.broadcast %cst_14 : f32 to vector<2x64xf32>
    %58 = arith.addf %57, %56 : vector<2x64xf32>
    %59 = arith.divf %57, %58 : vector<2x64xf32>
    %60 = vector.extract_strided_slice %41 {offsets = [0, 192], sizes = [2, 64], strides = [1, 1]} : vector<2x256xf32> to vector<2x64xf32>
    %61 = math.tanh %60 : vector<2x64xf32>
    %62 = arith.mulf %53, %33 : vector<2x64xf32>
    %63 = arith.mulf %47, %61 : vector<2x64xf32>
    %64 = arith.addf %62, %63 : vector<2x64xf32>
    %65 = math.tanh %64 : vector<2x64xf32>
    %66 = arith.mulf %59, %65 : vector<2x64xf32>
    %67 = arith.addf %36, %66 : vector<2x64xf32>
    %68 = vector.extract_strided_slice %0 {offsets = [0, 128], sizes = [2, 64], strides = [1, 1]} : vector<2x352xf32> to vector<2x64xf32>
    %69 = tpu.concatenate %68, %66 in 1 : vector<2x64xf32>, vector<2x64xf32> -> vector<2x128xf32>
    %cst_15 = arith.constant dense<0.000000e+00> : vector<2x256xf32>
    %70 = tpu.matmul %69, %1, %cst_15 {dimension_numbers = #tpu.dot_dimension_numbers<[1], [0], [0], [1], [0, 0, 1, 1], [], []>} : vector<2x128xf32>, vector<128x256xf32>, vector<2x256xf32> -> vector<2x256xf32>
    %71 = vector.broadcast %2 : vector<1x256xf32> to vector<2x256xf32>
    %72 = arith.addf %70, %71 : vector<2x256xf32>
    %73 = vector.extract_strided_slice %72 {offsets = [0, 0], sizes = [2, 64], strides = [1, 1]} : vector<2x256xf32> to vector<2x64xf32>
    %74 = arith.negf %73 : vector<2x64xf32>
    %75 = math.exp %74 : vector<2x64xf32>
    %cst_16 = arith.constant 1.000000e+00 : f32
    %76 = vector.broadcast %cst_16 : f32 to vector<2x64xf32>
    %77 = arith.addf %76, %75 : vector<2x64xf32>
    %78 = arith.divf %76, %77 : vector<2x64xf32>
    %79 = vector.extract_strided_slice %72 {offsets = [0, 64], sizes = [2, 64], strides = [1, 1]} : vector<2x256xf32> to vector<2x64xf32>
    %80 = arith.negf %79 : vector<2x64xf32>
    %81 = math.exp %80 : vector<2x64xf32>
    %cst_17 = arith.constant 1.000000e+00 : f32
    %82 = vector.broadcast %cst_17 : f32 to vector<2x64xf32>
    %83 = arith.addf %82, %81 : vector<2x64xf32>
    %84 = arith.divf %82, %83 : vector<2x64xf32>
    %85 = vector.extract_strided_slice %72 {offsets = [0, 128], sizes = [2, 64], strides = [1, 1]} : vector<2x256xf32> to vector<2x64xf32>
    %86 = arith.negf %85 : vector<2x64xf32>
    %87 = math.exp %86 : vector<2x64xf32>
    %cst_18 = arith.constant 1.000000e+00 : f32
    %88 = vector.broadcast %cst_18 : f32 to vector<2x64xf32>
    %89 = arith.addf %88, %87 : vector<2x64xf32>
    %90 = arith.divf %88, %89 : vector<2x64xf32>
    %91 = vector.extract_strided_slice %72 {offsets = [0, 192], sizes = [2, 64], strides = [1, 1]} : vector<2x256xf32> to vector<2x64xf32>
    %92 = math.tanh %91 : vector<2x64xf32>
    %93 = arith.mulf %84, %64 : vector<2x64xf32>
    %94 = arith.mulf %78, %92 : vector<2x64xf32>
    %95 = arith.addf %93, %94 : vector<2x64xf32>
    %96 = math.tanh %95 : vector<2x64xf32>
    %97 = arith.mulf %90, %96 : vector<2x64xf32>
    %98 = arith.addf %67, %97 : vector<2x64xf32>
    %99 = vector.extract_strided_slice %0 {offsets = [0, 192], sizes = [2, 64], strides = [1, 1]} : vector<2x352xf32> to vector<2x64xf32>
    %100 = tpu.concatenate %99, %97 in 1 : vector<2x64xf32>, vector<2x64xf32> -> vector<2x128xf32>
    %cst_19 = arith.constant dense<0.000000e+00> : vector<2x256xf32>
    %101 = tpu.matmul %100, %1, %cst_19 {dimension_numbers = #tpu.dot_dimension_numbers<[1], [0], [0], [1], [0, 0, 1, 1], [], []>} : vector<2x128xf32>, vector<128x256xf32>, vector<2x256xf32> -> vector<2x256xf32>
    %102 = vector.broadcast %2 : vector<1x256xf32> to vector<2x256xf32>
    %103 = arith.addf %101, %102 : vector<2x256xf32>
    %104 = vector.extract_strided_slice %103 {offsets = [0, 0], sizes = [2, 64], strides = [1, 1]} : vector<2x256xf32> to vector<2x64xf32>
    %105 = arith.negf %104 : vector<2x64xf32>
    %106 = math.exp %105 : vector<2x64xf32>
    %cst_20 = arith.constant 1.000000e+00 : f32
    %107 = vector.broadcast %cst_20 : f32 to vector<2x64xf32>
    %108 = arith.addf %107, %106 : vector<2x64xf32>
    %109 = arith.divf %107, %108 : vector<2x64xf32>
    %110 = vector.extract_strided_slice %103 {offsets = [0, 64], sizes = [2, 64], strides = [1, 1]} : vector<2x256xf32> to vector<2x64xf32>
    %111 = arith.negf %110 : vector<2x64xf32>
    %112 = math.exp %111 : vector<2x64xf32>
    %cst_21 = arith.constant 1.000000e+00 : f32
    %113 = vector.broadcast %cst_21 : f32 to vector<2x64xf32>
    %114 = arith.addf %113, %112 : vector<2x64xf32>
    %115 = arith.divf %113, %114 : vector<2x64xf32>
    %116 = vector.extract_strided_slice %103 {offsets = [0, 128], sizes = [2, 64], strides = [1, 1]} : vector<2x256xf32> to vector<2x64xf32>
    %117 = arith.negf %116 : vector<2x64xf32>
    %118 = math.exp %117 : vector<2x64xf32>
    %cst_22 = arith.constant 1.000000e+00 : f32
    %119 = vector.broadcast %cst_22 : f32 to vector<2x64xf32>
    %120 = arith.addf %119, %118 : vector<2x64xf32>
    %121 = arith.divf %119, %120 : vector<2x64xf32>
    %122 = vector.extract_strided_slice %103 {offsets = [0, 192], sizes = [2, 64], strides = [1, 1]} : vector<2x256xf32> to vector<2x64xf32>
    %123 = math.tanh %122 : vector<2x64xf32>
    %124 = arith.mulf %115, %95 : vector<2x64xf32>
    %125 = arith.mulf %109, %123 : vector<2x64xf32>
    %126 = arith.addf %124, %125 : vector<2x64xf32>
    %127 = math.tanh %126 : vector<2x64xf32>
    %128 = arith.mulf %121, %127 : vector<2x64xf32>
    %129 = arith.addf %98, %128 : vector<2x64xf32>
    %cst_23 = arith.constant 2.500000e-01 : f32
    %130 = vector.broadcast %cst_23 : f32 to vector<2x64xf32>
    %131 = arith.mulf %129, %130 : vector<2x64xf32>
    %132 = vector.extract_strided_slice %0 {offsets = [0, 328], sizes = [2, 8], strides = [1, 1]} : vector<2x352xf32> to vector<2x8xf32>
    %133 = vector.extract_strided_slice %0 {offsets = [0, 336], sizes = [2, 16], strides = [1, 1]} : vector<2x352xf32> to vector<2x16xf32>
    %134 = tpu.concatenate %132, %132 in 1 : vector<2x8xf32>, vector<2x8xf32> -> vector<2x16xf32>
    %135 = arith.subf %133, %134 : vector<2x16xf32>
    %136 = tpu.concatenate %132, %135 in 1 : vector<2x8xf32>, vector<2x16xf32> -> vector<2x24xf32>
    %c0_24 = arith.constant 0 : index
    %c0_25 = arith.constant 0 : index
    %137 = vector.load %arg5[%c0_24, %c0_25] : memref<1x24xf32, #tpu.memory_space<vmem>>, vector<1x24xf32>
    %c0_26 = arith.constant 0 : index
    %c0_27 = arith.constant 0 : index
    %138 = vector.load %arg6[%c0_26, %c0_27] : memref<1x24xf32, #tpu.memory_space<vmem>>, vector<1x24xf32>
    %139 = vector.extract_strided_slice %136 {offsets = [0, 0], sizes = [2, 8], strides = [1, 1]} : vector<2x24xf32> to vector<2x8xf32>
    %cst_28 = arith.constant dense<0.000000e+00> : vector<2xf32>
    %140 = vector.multi_reduction <add>, %139, %cst_28 [1] : vector<2x8xf32> to vector<2xf32>
    %141 = vector.shape_cast %140 : vector<2xf32> to vector<2x1xf32>
    %cst_29 = arith.constant 8.000000e+00 : f32
    %142 = vector.broadcast %cst_29 : f32 to vector<2x1xf32>
    %143 = arith.divf %141, %142 : vector<2x1xf32>
    %144 = vector.broadcast %143 : vector<2x1xf32> to vector<2x8xf32>
    %145 = arith.subf %139, %144 : vector<2x8xf32>
    %146 = arith.mulf %145, %145 : vector<2x8xf32>
    %cst_30 = arith.constant dense<0.000000e+00> : vector<2xf32>
    %147 = vector.multi_reduction <add>, %146, %cst_30 [1] : vector<2x8xf32> to vector<2xf32>
    %148 = vector.shape_cast %147 : vector<2xf32> to vector<2x1xf32>
    %cst_31 = arith.constant 8.000000e+00 : f32
    %149 = vector.broadcast %cst_31 : f32 to vector<2x1xf32>
    %150 = arith.divf %148, %149 : vector<2x1xf32>
    %151 = vector.broadcast %143 : vector<2x1xf32> to vector<2x8xf32>
    %152 = arith.subf %139, %151 : vector<2x8xf32>
    %cst_32 = arith.constant 9.99999974E-6 : f32
    %153 = vector.broadcast %cst_32 : f32 to vector<2x1xf32>
    %154 = arith.addf %150, %153 : vector<2x1xf32>
    %155 = math.rsqrt %154 : vector<2x1xf32>
    %156 = vector.broadcast %155 : vector<2x1xf32> to vector<2x8xf32>
    %157 = arith.mulf %152, %156 : vector<2x8xf32>
    %158 = vector.extract_strided_slice %136 {offsets = [0, 8], sizes = [2, 16], strides = [1, 1]} : vector<2x24xf32> to vector<2x16xf32>
    %cst_33 = arith.constant dense<0.000000e+00> : vector<2xf32>
    %159 = vector.multi_reduction <add>, %158, %cst_33 [1] : vector<2x16xf32> to vector<2xf32>
    %160 = vector.shape_cast %159 : vector<2xf32> to vector<2x1xf32>
    %cst_34 = arith.constant 1.600000e+01 : f32
    %161 = vector.broadcast %cst_34 : f32 to vector<2x1xf32>
    %162 = arith.divf %160, %161 : vector<2x1xf32>
    %163 = vector.broadcast %162 : vector<2x1xf32> to vector<2x16xf32>
    %164 = arith.subf %158, %163 : vector<2x16xf32>
    %165 = arith.mulf %164, %164 : vector<2x16xf32>
    %cst_35 = arith.constant dense<0.000000e+00> : vector<2xf32>
    %166 = vector.multi_reduction <add>, %165, %cst_35 [1] : vector<2x16xf32> to vector<2xf32>
    %167 = vector.shape_cast %166 : vector<2xf32> to vector<2x1xf32>
    %cst_36 = arith.constant 1.600000e+01 : f32
    %168 = vector.broadcast %cst_36 : f32 to vector<2x1xf32>
    %169 = arith.divf %167, %168 : vector<2x1xf32>
    %170 = vector.broadcast %162 : vector<2x1xf32> to vector<2x16xf32>
    %171 = arith.subf %158, %170 : vector<2x16xf32>
    %cst_37 = arith.constant 9.99999974E-6 : f32
    %172 = vector.broadcast %cst_37 : f32 to vector<2x1xf32>
    %173 = arith.addf %169, %172 : vector<2x1xf32>
    %174 = math.rsqrt %173 : vector<2x1xf32>
    %175 = vector.broadcast %174 : vector<2x1xf32> to vector<2x16xf32>
    %176 = arith.mulf %171, %175 : vector<2x16xf32>
    %177 = tpu.concatenate %157, %176 in 1 : vector<2x8xf32>, vector<2x16xf32> -> vector<2x24xf32>
    %178 = vector.broadcast %137 : vector<1x24xf32> to vector<2x24xf32>
    %179 = arith.mulf %177, %178 : vector<2x24xf32>
    %180 = vector.broadcast %138 : vector<1x24xf32> to vector<2x24xf32>
    %181 = arith.addf %179, %180 : vector<2x24xf32>
    %c0_38 = arith.constant 0 : index
    %c0_39 = arith.constant 0 : index
    %182 = vector.load %arg7[%c0_38, %c0_39] : memref<24x64xf32, #tpu.memory_space<vmem>>, vector<24x64xf32>
    %cst_40 = arith.constant dense<0.000000e+00> : vector<2x64xf32>
    %183 = tpu.matmul %181, %182, %cst_40 {dimension_numbers = #tpu.dot_dimension_numbers<[1], [0], [0], [1], [0, 0, 1, 1], [], []>} : vector<2x24xf32>, vector<24x64xf32>, vector<2x64xf32> -> vector<2x64xf32>
    %c0_41 = arith.constant 0 : index
    %c0_42 = arith.constant 0 : index
    %184 = vector.load %arg8[%c0_41, %c0_42] : memref<1x64xf32, #tpu.memory_space<vmem>>, vector<1x64xf32>
    %185 = vector.broadcast %184 : vector<1x64xf32> to vector<2x64xf32>
    %186 = arith.addf %183, %185 : vector<2x64xf32>
    %cst_43 = arith.constant 0.000000e+00 : f32
    %187 = vector.broadcast %cst_43 : f32 to vector<2x64xf32>
    %188 = arith.maximumf %186, %187 : vector<2x64xf32>
    %c0_44 = arith.constant 0 : index
    %c0_45 = arith.constant 0 : index
    %189 = vector.load %arg9[%c0_44, %c0_45] : memref<1x64xf32, #tpu.memory_space<vmem>>, vector<1x64xf32>
    %c0_46 = arith.constant 0 : index
    %c0_47 = arith.constant 0 : index
    %190 = vector.load %arg10[%c0_46, %c0_47] : memref<1x64xf32, #tpu.memory_space<vmem>>, vector<1x64xf32>
    %191 = vector.extract_strided_slice %188 {offsets = [0, 0], sizes = [2, 32], strides = [1, 1]} : vector<2x64xf32> to vector<2x32xf32>
    %cst_48 = arith.constant dense<0.000000e+00> : vector<2xf32>
    %192 = vector.multi_reduction <add>, %191, %cst_48 [1] : vector<2x32xf32> to vector<2xf32>
    %193 = vector.shape_cast %192 : vector<2xf32> to vector<2x1xf32>
    %cst_49 = arith.constant 3.200000e+01 : f32
    %194 = vector.broadcast %cst_49 : f32 to vector<2x1xf32>
    %195 = arith.divf %193, %194 : vector<2x1xf32>
    %196 = vector.broadcast %195 : vector<2x1xf32> to vector<2x32xf32>
    %197 = arith.subf %191, %196 : vector<2x32xf32>
    %198 = arith.mulf %197, %197 : vector<2x32xf32>
    %cst_50 = arith.constant dense<0.000000e+00> : vector<2xf32>
    %199 = vector.multi_reduction <add>, %198, %cst_50 [1] : vector<2x32xf32> to vector<2xf32>
    %200 = vector.shape_cast %199 : vector<2xf32> to vector<2x1xf32>
    %cst_51 = arith.constant 3.200000e+01 : f32
    %201 = vector.broadcast %cst_51 : f32 to vector<2x1xf32>
    %202 = arith.divf %200, %201 : vector<2x1xf32>
    %203 = vector.broadcast %195 : vector<2x1xf32> to vector<2x32xf32>
    %204 = arith.subf %191, %203 : vector<2x32xf32>
    %cst_52 = arith.constant 9.99999974E-6 : f32
    %205 = vector.broadcast %cst_52 : f32 to vector<2x1xf32>
    %206 = arith.addf %202, %205 : vector<2x1xf32>
    %207 = math.rsqrt %206 : vector<2x1xf32>
    %208 = vector.broadcast %207 : vector<2x1xf32> to vector<2x32xf32>
    %209 = arith.mulf %204, %208 : vector<2x32xf32>
    %210 = vector.extract_strided_slice %188 {offsets = [0, 32], sizes = [2, 32], strides = [1, 1]} : vector<2x64xf32> to vector<2x32xf32>
    %cst_53 = arith.constant dense<0.000000e+00> : vector<2xf32>
    %211 = vector.multi_reduction <add>, %210, %cst_53 [1] : vector<2x32xf32> to vector<2xf32>
    %212 = vector.shape_cast %211 : vector<2xf32> to vector<2x1xf32>
    %cst_54 = arith.constant 3.200000e+01 : f32
    %213 = vector.broadcast %cst_54 : f32 to vector<2x1xf32>
    %214 = arith.divf %212, %213 : vector<2x1xf32>
    %215 = vector.broadcast %214 : vector<2x1xf32> to vector<2x32xf32>
    %216 = arith.subf %210, %215 : vector<2x32xf32>
    %217 = arith.mulf %216, %216 : vector<2x32xf32>
    %cst_55 = arith.constant dense<0.000000e+00> : vector<2xf32>
    %218 = vector.multi_reduction <add>, %217, %cst_55 [1] : vector<2x32xf32> to vector<2xf32>
    %219 = vector.shape_cast %218 : vector<2xf32> to vector<2x1xf32>
    %cst_56 = arith.constant 3.200000e+01 : f32
    %220 = vector.broadcast %cst_56 : f32 to vector<2x1xf32>
    %221 = arith.divf %219, %220 : vector<2x1xf32>
    %222 = vector.broadcast %214 : vector<2x1xf32> to vector<2x32xf32>
    %223 = arith.subf %210, %222 : vector<2x32xf32>
    %cst_57 = arith.constant 9.99999974E-6 : f32
    %224 = vector.broadcast %cst_57 : f32 to vector<2x1xf32>
    %225 = arith.addf %221, %224 : vector<2x1xf32>
    %226 = math.rsqrt %225 : vector<2x1xf32>
    %227 = vector.broadcast %226 : vector<2x1xf32> to vector<2x32xf32>
    %228 = arith.mulf %223, %227 : vector<2x32xf32>
    %229 = tpu.concatenate %209, %228 in 1 : vector<2x32xf32>, vector<2x32xf32> -> vector<2x64xf32>
    %230 = vector.broadcast %189 : vector<1x64xf32> to vector<2x64xf32>
    %231 = arith.mulf %229, %230 : vector<2x64xf32>
    %232 = vector.broadcast %190 : vector<1x64xf32> to vector<2x64xf32>
    %233 = arith.addf %231, %232 : vector<2x64xf32>
    %c0_58 = arith.constant 0 : index
    %c0_59 = arith.constant 0 : index
    %234 = vector.load %arg11[%c0_58, %c0_59] : memref<64x64xf32, #tpu.memory_space<vmem>>, vector<64x64xf32>
    %cst_60 = arith.constant dense<0.000000e+00> : vector<2x64xf32>
    %235 = tpu.matmul %233, %234, %cst_60 {dimension_numbers = #tpu.dot_dimension_numbers<[1], [0], [0], [1], [0, 0, 1, 1], [], []>} : vector<2x64xf32>, vector<64x64xf32>, vector<2x64xf32> -> vector<2x64xf32>
    %c0_61 = arith.constant 0 : index
    %c0_62 = arith.constant 0 : index
    %236 = vector.load %arg12[%c0_61, %c0_62] : memref<1x64xf32, #tpu.memory_space<vmem>>, vector<1x64xf32>
    %237 = vector.broadcast %236 : vector<1x64xf32> to vector<2x64xf32>
    %238 = arith.addf %235, %237 : vector<2x64xf32>
    %cst_63 = arith.constant 0.000000e+00 : f32
    %239 = vector.broadcast %cst_63 : f32 to vector<2x64xf32>
    %240 = arith.maximumf %238, %239 : vector<2x64xf32>
    %c0_64 = arith.constant 0 : index
    %c0_65 = arith.constant 0 : index
    %241 = vector.load %arg13[%c0_64, %c0_65] : memref<1x64xf32, #tpu.memory_space<vmem>>, vector<1x64xf32>
    %c0_66 = arith.constant 0 : index
    %c0_67 = arith.constant 0 : index
    %242 = vector.load %arg14[%c0_66, %c0_67] : memref<1x64xf32, #tpu.memory_space<vmem>>, vector<1x64xf32>
    %243 = vector.extract_strided_slice %240 {offsets = [0, 0], sizes = [2, 32], strides = [1, 1]} : vector<2x64xf32> to vector<2x32xf32>
    %cst_68 = arith.constant dense<0.000000e+00> : vector<2xf32>
    %244 = vector.multi_reduction <add>, %243, %cst_68 [1] : vector<2x32xf32> to vector<2xf32>
    %245 = vector.shape_cast %244 : vector<2xf32> to vector<2x1xf32>
    %cst_69 = arith.constant 3.200000e+01 : f32
    %246 = vector.broadcast %cst_69 : f32 to vector<2x1xf32>
    %247 = arith.divf %245, %246 : vector<2x1xf32>
    %248 = vector.broadcast %247 : vector<2x1xf32> to vector<2x32xf32>
    %249 = arith.subf %243, %248 : vector<2x32xf32>
    %250 = arith.mulf %249, %249 : vector<2x32xf32>
    %cst_70 = arith.constant dense<0.000000e+00> : vector<2xf32>
    %251 = vector.multi_reduction <add>, %250, %cst_70 [1] : vector<2x32xf32> to vector<2xf32>
    %252 = vector.shape_cast %251 : vector<2xf32> to vector<2x1xf32>
    %cst_71 = arith.constant 3.200000e+01 : f32
    %253 = vector.broadcast %cst_71 : f32 to vector<2x1xf32>
    %254 = arith.divf %252, %253 : vector<2x1xf32>
    %255 = vector.broadcast %247 : vector<2x1xf32> to vector<2x32xf32>
    %256 = arith.subf %243, %255 : vector<2x32xf32>
    %cst_72 = arith.constant 9.99999974E-6 : f32
    %257 = vector.broadcast %cst_72 : f32 to vector<2x1xf32>
    %258 = arith.addf %254, %257 : vector<2x1xf32>
    %259 = math.rsqrt %258 : vector<2x1xf32>
    %260 = vector.broadcast %259 : vector<2x1xf32> to vector<2x32xf32>
    %261 = arith.mulf %256, %260 : vector<2x32xf32>
    %262 = vector.extract_strided_slice %240 {offsets = [0, 32], sizes = [2, 32], strides = [1, 1]} : vector<2x64xf32> to vector<2x32xf32>
    %cst_73 = arith.constant dense<0.000000e+00> : vector<2xf32>
    %263 = vector.multi_reduction <add>, %262, %cst_73 [1] : vector<2x32xf32> to vector<2xf32>
    %264 = vector.shape_cast %263 : vector<2xf32> to vector<2x1xf32>
    %cst_74 = arith.constant 3.200000e+01 : f32
    %265 = vector.broadcast %cst_74 : f32 to vector<2x1xf32>
    %266 = arith.divf %264, %265 : vector<2x1xf32>
    %267 = vector.broadcast %266 : vector<2x1xf32> to vector<2x32xf32>
    %268 = arith.subf %262, %267 : vector<2x32xf32>
    %269 = arith.mulf %268, %268 : vector<2x32xf32>
    %cst_75 = arith.constant dense<0.000000e+00> : vector<2xf32>
    %270 = vector.multi_reduction <add>, %269, %cst_75 [1] : vector<2x32xf32> to vector<2xf32>
    %271 = vector.shape_cast %270 : vector<2xf32> to vector<2x1xf32>
    %cst_76 = arith.constant 3.200000e+01 : f32
    %272 = vector.broadcast %cst_76 : f32 to vector<2x1xf32>
    %273 = arith.divf %271, %272 : vector<2x1xf32>
    %274 = vector.broadcast %266 : vector<2x1xf32> to vector<2x32xf32>
    %275 = arith.subf %262, %274 : vector<2x32xf32>
    %cst_77 = arith.constant 9.99999974E-6 : f32
    %276 = vector.broadcast %cst_77 : f32 to vector<2x1xf32>
    %277 = arith.addf %273, %276 : vector<2x1xf32>
    %278 = math.rsqrt %277 : vector<2x1xf32>
    %279 = vector.broadcast %278 : vector<2x1xf32> to vector<2x32xf32>
    %280 = arith.mulf %275, %279 : vector<2x32xf32>
    %281 = tpu.concatenate %261, %280 in 1 : vector<2x32xf32>, vector<2x32xf32> -> vector<2x64xf32>
    %282 = vector.broadcast %241 : vector<1x64xf32> to vector<2x64xf32>
    %283 = arith.mulf %281, %282 : vector<2x64xf32>
    %284 = vector.broadcast %242 : vector<1x64xf32> to vector<2x64xf32>
    %285 = arith.addf %283, %284 : vector<2x64xf32>
    %c0_78 = arith.constant 0 : index
    %c0_79 = arith.constant 0 : index
    %c0_80 = arith.constant 0 : index
    %286 = vector.load %arg1[%c0_78, %c0_79, %c0_80] : memref<2x1x32xf32, #tpu.memory_space<vmem>>, vector<2x1x32xf32>
    %287 = vector.shape_cast %286 : vector<2x1x32xf32> to vector<2x32xf32>
    %c0_81 = arith.constant 0 : index
    %c0_82 = arith.constant 0 : index
    %288 = vector.load %arg2[%c0_81, %c0_82] : memref<2x1xf32, #tpu.memory_space<vmem>>, vector<2x1xf32>
    %289 = vector.broadcast %288 : vector<2x1xf32> to vector<2x32xf32>
    %290 = arith.mulf %287, %289 : vector<2x32xf32>
    %291 = tpu.concatenate %131, %285 in 1 : vector<2x64xf32>, vector<2x64xf32> -> vector<2x128xf32>
    %292 = tpu.concatenate %291, %290 in 1 : vector<2x128xf32>, vector<2x32xf32> -> vector<2x160xf32>
    %c0_83 = arith.constant 0 : index
    %c0_84 = arith.constant 0 : index
    %293 = vector.load %arg15[%c0_83, %c0_84] : memref<160x128xf32, #tpu.memory_space<vmem>>, vector<160x128xf32>
    %cst_85 = arith.constant dense<0.000000e+00> : vector<2x128xf32>
    %294 = tpu.matmul %292, %293, %cst_85 {dimension_numbers = #tpu.dot_dimension_numbers<[1], [0], [0], [1], [0, 0, 1, 1], [], []>} : vector<2x160xf32>, vector<160x128xf32>, vector<2x128xf32> -> vector<2x128xf32>
    %c0_86 = arith.constant 0 : index
    %c0_87 = arith.constant 0 : index
    %295 = vector.load %arg16[%c0_86, %c0_87] : memref<1x128xf32, #tpu.memory_space<vmem>>, vector<1x128xf32>
    %296 = vector.broadcast %295 : vector<1x128xf32> to vector<2x128xf32>
    %297 = arith.addf %294, %296 : vector<2x128xf32>
    %298 = vector.extract_strided_slice %297 {offsets = [0, 0], sizes = [2, 32], strides = [1, 1]} : vector<2x128xf32> to vector<2x32xf32>
    %299 = arith.negf %298 : vector<2x32xf32>
    %300 = math.exp %299 : vector<2x32xf32>
    %cst_88 = arith.constant 1.000000e+00 : f32
    %301 = vector.broadcast %cst_88 : f32 to vector<2x32xf32>
    %302 = arith.addf %301, %300 : vector<2x32xf32>
    %303 = arith.divf %301, %302 : vector<2x32xf32>
    %304 = vector.extract_strided_slice %297 {offsets = [0, 32], sizes = [2, 32], strides = [1, 1]} : vector<2x128xf32> to vector<2x32xf32>
    %305 = arith.negf %304 : vector<2x32xf32>
    %306 = math.exp %305 : vector<2x32xf32>
    %cst_89 = arith.constant 1.000000e+00 : f32
    %307 = vector.broadcast %cst_89 : f32 to vector<2x32xf32>
    %308 = arith.addf %307, %306 : vector<2x32xf32>
    %309 = arith.divf %307, %308 : vector<2x32xf32>
    %310 = vector.extract_strided_slice %297 {offsets = [0, 64], sizes = [2, 32], strides = [1, 1]} : vector<2x128xf32> to vector<2x32xf32>
    %311 = vector.extract_strided_slice %297 {offsets = [0, 96], sizes = [2, 32], strides = [1, 1]} : vector<2x128xf32> to vector<2x32xf32>
    %312 = arith.mulf %303, %311 : vector<2x32xf32>
    %313 = arith.addf %310, %312 : vector<2x32xf32>
    %314 = math.tanh %313 : vector<2x32xf32>
    %cst_90 = arith.constant 1.000000e+00 : f32
    %315 = vector.broadcast %cst_90 : f32 to vector<2x32xf32>
    %316 = arith.subf %315, %309 : vector<2x32xf32>
    %317 = arith.mulf %316, %314 : vector<2x32xf32>
    %318 = arith.mulf %309, %290 : vector<2x32xf32>
    %319 = arith.addf %317, %318 : vector<2x32xf32>
    %c0_91 = arith.constant 0 : index
    %c0_92 = arith.constant 0 : index
    %c0_93 = arith.constant 0 : index
    %320 = vector.load %arg22[%c0_91, %c0_92, %c0_93] : memref<2x1x32xf32, #tpu.memory_space<vmem>>, vector<2x1x32xf32>
    %321 = vector.shape_cast %320 : vector<2x1x32xf32> to vector<2x32xf32>
    %322 = vector.shape_cast %319 : vector<2x32xf32> to vector<2x1x32xf32>
    tpu.vector_store %arg22[%c0_91, %c0_92, %c0_93], %322 {strides = array<i32>} : memref<2x1x32xf32, #tpu.memory_space<vmem>>, vector<2x1x32xf32>,
    %c0_94 = arith.constant 0 : index
    %c0_95 = arith.constant 0 : index
    %323 = vector.load %arg17[%c0_94, %c0_95] : memref<1x32xf32, #tpu.memory_space<vmem>>, vector<1x32xf32>
    %c0_96 = arith.constant 0 : index
    %c0_97 = arith.constant 0 : index
    %324 = vector.load %arg18[%c0_96, %c0_97] : memref<1x32xf32, #tpu.memory_space<vmem>>, vector<1x32xf32>
    %cst_98 = arith.constant dense<0.000000e+00> : vector<2xf32>
    %325 = vector.multi_reduction <add>, %319, %cst_98 [1] : vector<2x32xf32> to vector<2xf32>
    %326 = vector.shape_cast %325 : vector<2xf32> to vector<2x1xf32>
    %cst_99 = arith.constant 3.200000e+01 : f32
    %327 = vector.broadcast %cst_99 : f32 to vector<2x1xf32>
    %328 = arith.divf %326, %327 : vector<2x1xf32>
    %329 = vector.broadcast %328 : vector<2x1xf32> to vector<2x32xf32>
    %330 = arith.subf %319, %329 : vector<2x32xf32>
    %331 = arith.mulf %330, %330 : vector<2x32xf32>
    %cst_100 = arith.constant dense<0.000000e+00> : vector<2xf32>
    %332 = vector.multi_reduction <add>, %331, %cst_100 [1] : vector<2x32xf32> to vector<2xf32>
    %333 = vector.shape_cast %332 : vector<2xf32> to vector<2x1xf32>
    %cst_101 = arith.constant 3.200000e+01 : f32
    %334 = vector.broadcast %cst_101 : f32 to vector<2x1xf32>
    %335 = arith.divf %333, %334 : vector<2x1xf32>
    %336 = vector.broadcast %328 : vector<2x1xf32> to vector<2x32xf32>
    %337 = arith.subf %319, %336 : vector<2x32xf32>
    %cst_102 = arith.constant 9.99999974E-6 : f32
    %338 = vector.broadcast %cst_102 : f32 to vector<2x1xf32>
    %339 = arith.addf %335, %338 : vector<2x1xf32>
    %340 = math.rsqrt %339 : vector<2x1xf32>
    %341 = vector.broadcast %340 : vector<2x1xf32> to vector<2x32xf32>
    %342 = arith.mulf %337, %341 : vector<2x32xf32>
    %343 = vector.broadcast %323 : vector<1x32xf32> to vector<2x32xf32>
    %344 = arith.mulf %342, %343 : vector<2x32xf32>
    %345 = vector.broadcast %324 : vector<1x32xf32> to vector<2x32xf32>
    %346 = arith.addf %344, %345 : vector<2x32xf32>
    %c0_103 = arith.constant 0 : index
    %c0_104 = arith.constant 0 : index
    %347 = vector.load %arg19[%c0_103, %c0_104] : memref<32x1xf32, #tpu.memory_space<vmem>>, vector<32x1xf32>
    %cst_105 = arith.constant dense<0.000000e+00> : vector<2x1xf32>
    %348 = tpu.matmul %346, %347, %cst_105 {dimension_numbers = #tpu.dot_dimension_numbers<[1], [0], [0], [1], [0, 0, 1, 1], [], []>} : vector<2x32xf32>, vector<32x1xf32>, vector<2x1xf32> -> vector<2x1xf32>
    %c0_106 = arith.constant 0 : index
    %c0_107 = arith.constant 0 : index
    %349 = vector.load %arg20[%c0_106, %c0_107] : memref<1x1xf32, #tpu.memory_space<vmem>>, vector<1x1xf32>
    %350 = vector.broadcast %349 : vector<1x1xf32> to vector<2x1xf32>
    %351 = arith.addf %348, %350 : vector<2x1xf32>
    %c0_108 = arith.constant 0 : index
    %c0_109 = arith.constant 0 : index
    %352 = vector.load %arg21[%c0_108, %c0_109] : memref<2x1xf32, #tpu.memory_space<vmem>>, vector<2x1xf32>
    tpu.vector_store %arg21[%c0_108, %c0_109], %351 {strides = array<i32>} : memref<2x1xf32, #tpu.memory_space<vmem>>, vector<2x1xf32>,
    return
  }
}

</mosaic_0001>

<llo_original>
// kernel: r_critic_forward.1
$region0: #{r_critic_forward.1}
  #allocation0 [shape = 'u32[]', space=smem, size = 0x4, offset = 0x4, fixed_abs, tag = 'smem constant byte address 0x4 - core index']
  #allocation1 [shape = 'u32[144,128]{1,0:T(1,128)}', space=vmem, size = 0x12000, scoped, tag = 'internal scratch']
  #allocation2 [shape = 'f32[1,1]{1,0:T(1,128)S(1)}', space=vmem, size = 0x200, scoped, tag = 'scoped memory for r_critic_forward.1']
  %s0 = inlined_call_operand.hbm [shape: f32[2,352], index: 0, kind: input, shape index: {}]
  %s1 = inlined_call_operand.vmem [shape: f32[2,1,32], index: 1, kind: input, shape index: {}, may-alias: {1,22}]
  %s2 = inlined_call_operand.vmem [shape: f32[2,1], index: 2, kind: input, shape index: {}]
  %s3 = inlined_call_operand.hbm [shape: f32[128,256], index: 3, kind: input, shape index: {}]
  %s4 = inlined_call_operand.vmem [shape: f32[1,256], index: 4, kind: input, shape index: {}]
  %s5 = inlined_call_operand.vmem [shape: f32[1,24], index: 5, kind: input, shape index: {}]
  %s6 = inlined_call_operand.vmem [shape: f32[1,24], index: 6, kind: input, shape index: {}]
  %s7 = inlined_call_operand.hbm [shape: f32[24,64], index: 7, kind: input, shape index: {}]
  %s8 = inlined_call_operand.vmem [shape: f32[1,64], index: 8, kind: input, shape index: {}, may-alias: {8,10,12,14}]
  %s9 = inlined_call_operand.vmem [shape: f32[1,64], index: 9, kind: input, shape index: {}, may-alias: {9,13}]
  %s10 = inlined_call_operand.vmem [shape: f32[1,64], index: 10, kind: input, shape index: {}, may-alias: {8,10,12,14}]
  %s11 = inlined_call_operand.vmem [shape: f32[64,64], index: 11, kind: input, shape index: {}]
  %s12 = inlined_call_operand.vmem [shape: f32[1,64], index: 12, kind: input, shape index: {}, may-alias: {8,10,12,14}]
  %s13 = inlined_call_operand.vmem [shape: f32[1,64], index: 13, kind: input, shape index: {}, may-alias: {9,13}]
  %s14 = inlined_call_operand.vmem [shape: f32[1,64], index: 14, kind: input, shape index: {}, may-alias: {8,10,12,14}]
  %s15 = inlined_call_operand.hbm [shape: f32[160,128], index: 15, kind: input, shape index: {}]
  %s16 = inlined_call_operand.vmem [shape: f32[1,128], index: 16, kind: input, shape index: {}]
  %s17 = inlined_call_operand.vmem [shape: f32[1,32], index: 17, kind: input, shape index: {}]
  %s18 = inlined_call_operand.vmem [shape: f32[1,32], index: 18, kind: input, shape index: {}]
  %s19 = inlined_call_operand.hbm [shape: f32[32,1], index: 19, kind: input, shape index: {}]
  %s20 = inlined_call_operand.<no memory space> [shape: f32[1,1], index: 20, kind: input, shape index: {}]
  %s21 = inlined_call_operand.vmem [shape: f32[2,1], index: 21, kind: output, shape index: {0}]
  %s22 = inlined_call_operand.vmem [shape: f32[2,1,32], index: 22, kind: output, shape index: {1}, may-alias: {1,22}]
  %23 = xla_tuple %s21, %s22
  %s24 = sld [smem:[#allocation0]]
  $region122: #{r_critic_forward.1} parent=0
    _
  %s26 = ssub.s32 1, %s24
  %s27 = scalar_select 0, %s26, %s24
  %v28 = vstv %s20
  %29 = vst [vmem:[#allocation2] sm:$0x1] %v28
  $region1: #{r_critic_forward.1} parent=0
    #allocation3 [shape = 'u8[3072]{0}', space=vmem, size = 0xc00, scoped, tag = 'input window, operand 0, single buffered']
    #allocation4 [shape = 's32[1]{0}', space=sflag, size = 0x4, scoped, tag = 'scoped memory for r_critic_forward.1']
    #allocation5 [shape = 'u8[131072]{0}', space=vmem, size = 0x20000, scoped, tag = 'input window, operand 3, single buffered']
    #allocation6 [shape = 's32[1]{0}', space=sflag, size = 0x4, scoped, tag = 'scoped memory for r_critic_forward.1']
    #allocation7 [shape = 'u8[12288]{0}', space=vmem, size = 0x3000, scoped, tag = 'input window, operand 7, single buffered']
    #allocation8 [shape = 'u8[81920]{0}', space=vmem, size = 0x14000, scoped, tag = 'input window, operand 15, single buffered']
    #allocation9 [shape = 's32[1]{0}', space=sflag, size = 0x4, scoped, tag = 'scoped memory for r_critic_forward.1']
    #allocation10 [shape = 'u8[16384]{0}', space=vmem, size = 0x4000, scoped, tag = 'input window, operand 19, single buffered']
    %30 = vsyncpa [#allocation4], 0
    %31 = vsyncpa [#allocation6], 0
    %32 = vsyncpa [#allocation9], 0
    // Predicated region
    $region2: #{r_critic_forward.1} parent=1 // pred_check
      _
    $region3: #{r_critic_forward.1} parent=1 // pred_check_branch
      %34 = sbr.rel (0) target = $region5
    $region4: #{r_critic_forward.1} parent=1 // pred_region
      %s36 = ssub.s32 96, 96
      %37 = vsyncadd [#allocation4], %s36
      %s39 = sshll.u32 [#allocation3], 4
      %s40 = int_to_ptr.vmem [resolvable:$true] %s39
      %42 = dma.hbm_to_vmem [thread:$0]  %s0, 96, %s40, [#allocation4]
    $region5: #{r_critic_forward.1} parent=1 // pred_fallthru
      _
    // Predicated region
    $region6: #{r_critic_forward.1} parent=1 // pred_check
      _
    $region7: #{r_critic_forward.1} parent=1 // pred_check_branch
      %44 = sbr.rel (0) target = $region9
    $region8: #{r_critic_forward.1} parent=1 // pred_region
      _
    $region9: #{r_critic_forward.1} parent=1 // pred_fallthru
      _
    // Predicated region
    $region10: #{r_critic_forward.1} parent=1 // pred_check
      _
    $region11: #{r_critic_forward.1} parent=1 // pred_check_branch
      %46 = sbr.rel (0) target = $region13
    $region12: #{r_critic_forward.1} parent=1 // pred_region
      _
    $region13: #{r_critic_forward.1} parent=1 // pred_fallthru
      _
    // Predicated region
    $region14: #{r_critic_forward.1} parent=1 // pred_check
      _
    $region15: #{r_critic_forward.1} parent=1 // pred_check_branch
      %48 = sbr.rel (0) target = $region17
    $region16: #{r_critic_forward.1} parent=1 // pred_region
      %s50 = ssub.s32 4096, 4096
      %51 = vsyncadd [#allocation6], %s50
      %s52 = sshll.u32 [#allocation5], 4
      %s53 = int_to_ptr.vmem [resolvable:$true] %s52
      %58 = dma.hbm_to_vmem [thread:$0]  %s3, 4096, %s53, [#allocation6], 256, 256, 16
    $region17: #{r_critic_forward.1} parent=1 // pred_fallthru
      _
    // Predicated region
    $region18: #{r_critic_forward.1} parent=1 // pred_check
      _
    $region19: #{r_critic_forward.1} parent=1 // pred_check_branch
      %60 = sbr.rel (0) target = $region21
    $region20: #{r_critic_forward.1} parent=1 // pred_region
      _
    $region21: #{r_critic_forward.1} parent=1 // pred_fallthru
      _
    // Predicated region
    $region22: #{r_critic_forward.1} parent=1 // pred_check
      _
    $region23: #{r_critic_forward.1} parent=1 // pred_check_branch
      %62 = sbr.rel (0) target = $region25
    $region24: #{r_critic_forward.1} parent=1 // pred_region
      _
    $region25: #{r_critic_forward.1} parent=1 // pred_fallthru
      _
    // Predicated region
    $region26: #{r_critic_forward.1} parent=1 // pred_check
      _
    $region27: #{r_critic_forward.1} parent=1 // pred_check_branch
      %64 = sbr.rel (0) target = $region29
    $region28: #{r_critic_forward.1} parent=1 // pred_region
      _
    $region29: #{r_critic_forward.1} parent=1 // pred_fallthru
      _
    // Predicated region
    $region30: #{r_critic_forward.1} parent=1 // pred_check
      _
    $region31: #{r_critic_forward.1} parent=1 // pred_check_branch
      %66 = sbr.rel (0) target = $region33
    $region32: #{r_critic_forward.1} parent=1 // pred_region
      %s68 = ssub.s32 384, 384
      %69 = vsyncadd [#allocation6], %s68
      %s70 = sshll.u32 [#allocation7], 4
      %s71 = int_to_ptr.vmem [resolvable:$true] %s70
      %76 = dma.hbm_to_vmem [thread:$0]  %s7, 384, %s71, [#allocation6], 128, 128, 8
    $region33: #{r_critic_forward.1} parent=1 // pred_fallthru
      _
    // Predicated region
    $region34: #{r_critic_forward.1} parent=1 // pred_check
      _
    $region35: #{r_critic_forward.1} parent=1 // pred_check_branch
      %78 = sbr.rel (0) target = $region37
    $region36: #{r_critic_forward.1} parent=1 // pred_region
      _
    $region37: #{r_critic_forward.1} parent=1 // pred_fallthru
      _
    // Predicated region
    $region38: #{r_critic_forward.1} parent=1 // pred_check
      _
    $region39: #{r_critic_forward.1} parent=1 // pred_check_branch
      %80 = sbr.rel (0) target = $region41
    $region40: #{r_critic_forward.1} parent=1 // pred_region
      _
    $region41: #{r_critic_forward.1} parent=1 // pred_fallthru
      _
    // Predicated region
    $region42: #{r_critic_forward.1} parent=1 // pred_check
      _
    $region43: #{r_critic_forward.1} parent=1 // pred_check_branch
      %82 = sbr.rel (0) target = $region45
    $region44: #{r_critic_forward.1} parent=1 // pred_region
      _
    $region45: #{r_critic_forward.1} parent=1 // pred_fallthru
      _
    // Predicated region
    $region46: #{r_critic_forward.1} parent=1 // pred_check
      _
    $region47: #{r_critic_forward.1} parent=1 // pred_check_branch
      %84 = sbr.rel (0) target = $region49
    $region48: #{r_critic_forward.1} parent=1 // pred_region
      _
    $region49: #{r_critic_forward.1} parent=1 // pred_fallthru
      _
    // Predicated region
    $region50: #{r_critic_forward.1} parent=1 // pred_check
      _
    $region51: #{r_critic_forward.1} parent=1 // pred_check_branch
      %86 = sbr.rel (0) target = $region53
    $region52: #{r_critic_forward.1} parent=1 // pred_region
      _
    $region53: #{r_critic_forward.1} parent=1 // pred_fallthru
      _
    // Predicated region
    $region54: #{r_critic_forward.1} parent=1 // pred_check
      _
    $region55: #{r_critic_forward.1} parent=1 // pred_check_branch
      %88 = sbr.rel (0) target = $region57
    $region56: #{r_critic_forward.1} parent=1 // pred_region
      _
    $region57: #{r_critic_forward.1} parent=1 // pred_fallthru
      _
    // Predicated region
    $region58: #{r_critic_forward.1} parent=1 // pred_check
      _
    $region59: #{r_critic_forward.1} parent=1 // pred_check_branch
      %90 = sbr.rel (0) target = $region61
    $region60: #{r_critic_forward.1} parent=1 // pred_region
      _
    $region61: #{r_critic_forward.1} parent=1 // pred_fallthru
      _
    // Predicated region
    $region62: #{r_critic_forward.1} parent=1 // pred_check
      _
    $region63: #{r_critic_forward.1} parent=1 // pred_check_branch
      %92 = sbr.rel (0) target = $region65
    $region64: #{r_critic_forward.1} parent=1 // pred_region
      %s94 = ssub.s32 2560, 2560
      %95 = vsyncadd [#allocation9], %s94
      %s96 = sshll.u32 [#allocation8], 4
      %s97 = int_to_ptr.vmem [resolvable:$true] %s96
      %102 = dma.hbm_to_vmem [thread:$0]  %s15, 2560, %s97, [#allocation9], 128, 128, 8
    $region65: #{r_critic_forward.1} parent=1 // pred_fallthru
      _
    // Predicated region
    $region66: #{r_critic_forward.1} parent=1 // pred_check
      _
    $region67: #{r_critic_forward.1} parent=1 // pred_check_branch
      %104 = sbr.rel (0) target = $region69
    $region68: #{r_critic_forward.1} parent=1 // pred_region
      _
    $region69: #{r_critic_forward.1} parent=1 // pred_fallthru
      _
    // Predicated region
    $region70: #{r_critic_forward.1} parent=1 // pred_check
      _
    $region71: #{r_critic_forward.1} parent=1 // pred_check_branch
      %106 = sbr.rel (0) target = $region73
    $region72: #{r_critic_forward.1} parent=1 // pred_region
      _
    $region73: #{r_critic_forward.1} parent=1 // pred_fallthru
      _
    // Predicated region
    $region74: #{r_critic_forward.1} parent=1 // pred_check
      _
    $region75: #{r_critic_forward.1} parent=1 // pred_check_branch
      %108 = sbr.rel (0) target = $region77
    $region76: #{r_critic_forward.1} parent=1 // pred_region
      _
    $region77: #{r_critic_forward.1} parent=1 // pred_fallthru
      _
    // Predicated region
    $region78: #{r_critic_forward.1} parent=1 // pred_check
      _
    $region79: #{r_critic_forward.1} parent=1 // pred_check_branch
      %110 = sbr.rel (0) target = $region81
    $region80: #{r_critic_forward.1} parent=1 // pred_region
      %s112 = ssub.s32 512, 512
      %113 = vsyncadd [#allocation9], %s112
      %s114 = sshll.u32 [#allocation10], 4
      %s115 = int_to_ptr.vmem [resolvable:$true] %s114
      %120 = dma.hbm_to_vmem [thread:$0]  %s19, 512, %s115, [#allocation9], 128, 128, 8
    $region81: #{r_critic_forward.1} parent=1 // pred_fallthru
      _
    // Predicated region
    $region82: #{r_critic_forward.1} parent=1 // pred_check
      _
    $region83: #{r_critic_forward.1} parent=1 // pred_check_branch
      %122 = sbr.rel (0) target = $region85
    $region84: #{r_critic_forward.1} parent=1 // pred_region
      _
    $region85: #{r_critic_forward.1} parent=1 // pred_fallthru
      _
    // Predicated region
    $region86: #{r_critic_forward.1} parent=1 // pred_check
      _
    $region87: #{r_critic_forward.1} parent=1 // pred_check_branch
      %124 = sbr.rel (0) target = $region89
    $region88: #{r_critic_forward.1} parent=1 // pred_region
      %125 = dma.done [#allocation4], 96
    $region89: #{r_critic_forward.1} parent=1 // pred_fallthru
      _
    // Predicated region
    $region90: #{r_critic_forward.1} parent=1 // pred_check
      _
    $region91: #{r_critic_forward.1} parent=1 // pred_check_branch
      %127 = sbr.rel (0) target = $region93
    $region92: #{r_critic_forward.1} parent=1 // pred_region
      %128 = dma.done [#allocation6], 4096
    $region93: #{r_critic_forward.1} parent=1 // pred_fallthru
      _
    // Predicated region
    $region94: #{r_critic_forward.1} parent=1 // pred_check
      _
    $region95: #{r_critic_forward.1} parent=1 // pred_check_branch
      %130 = sbr.rel (0) target = $region97
    $region96: #{r_critic_forward.1} parent=1 // pred_region
      %131 = dma.done [#allocation6], 384
    $region97: #{r_critic_forward.1} parent=1 // pred_fallthru
      _
    // Predicated region
    $region98: #{r_critic_forward.1} parent=1 // pred_check
      _
    $region99: #{r_critic_forward.1} parent=1 // pred_check_branch
      %133 = sbr.rel (0) target = $region101
    $region100: #{r_critic_forward.1} parent=1 // pred_region
      %134 = dma.done [#allocation9], 2560
    $region101: #{r_critic_forward.1} parent=1 // pred_fallthru
      _
    // Predicated region
    $region102: #{r_critic_forward.1} parent=1 // pred_check
      _
    $region103: #{r_critic_forward.1} parent=1 // pred_check_branch
      %136 = sbr.rel (0) target = $region105
    $region104: #{r_critic_forward.1} parent=1 // pred_region
      %137 = dma.done [#allocation9], 512
    $region105: #{r_critic_forward.1} parent=1 // pred_fallthru
      _
    %v138 = vld [vmem:[#allocation3] sm:$0x3f]
    %v139 = vld [vmem:[#allocation5] sm:$0xff]
    %v140 = vld [vmem:[#allocation5 + $0x8] sm:$0xff]
    %v141 = vld [vmem:[#allocation5 + $0x10] sm:$0xff]
    %v142 = vld [vmem:[#allocation5 + $0x18] sm:$0xff]
    %v143 = vld [vmem:[#allocation5 + $0x20] sm:$0xff]
    %v144 = vld [vmem:[#allocation5 + $0x28] sm:$0xff]
    %v145 = vld [vmem:[#allocation5 + $0x30] sm:$0xff]
    %v146 = vld [vmem:[#allocation5 + $0x38] sm:$0xff]
    %v147 = vld [vmem:[#allocation5 + $0x40] sm:$0xff]
    %v148 = vld [vmem:[#allocation5 + $0x48] sm:$0xff]
    %v149 = vld [vmem:[#allocation5 + $0x50] sm:$0xff]
    %v150 = vld [vmem:[#allocation5 + $0x58] sm:$0xff]
    %v151 = vld [vmem:[#allocation5 + $0x60] sm:$0xff]
    %v152 = vld [vmem:[#allocation5 + $0x68] sm:$0xff]
    %v153 = vld [vmem:[#allocation5 + $0x70] sm:$0xff]
    %v154 = vld [vmem:[#allocation5 + $0x78] sm:$0xff]
    %v155 = vld [vmem:[#allocation5 + $0x80] sm:$0xff]
    %v156 = vld [vmem:[#allocation5 + $0x88] sm:$0xff]
    %v157 = vld [vmem:[#allocation5 + $0x90] sm:$0xff]
    %v158 = vld [vmem:[#allocation5 + $0x98] sm:$0xff]
    %v159 = vld [vmem:[#allocation5 + $0xa0] sm:$0xff]
    %v160 = vld [vmem:[#allocation5 + $0xa8] sm:$0xff]
    %v161 = vld [vmem:[#allocation5 + $0xb0] sm:$0xff]
    %v162 = vld [vmem:[#allocation5 + $0xb8] sm:$0xff]
    %v163 = vld [vmem:[#allocation5 + $0xc0] sm:$0xff]
    %v164 = vld [vmem:[#allocation5 + $0xc8] sm:$0xff]
    %v165 = vld [vmem:[#allocation5 + $0xd0] sm:$0xff]
    %v166 = vld [vmem:[#allocation5 + $0xd8] sm:$0xff]
    %v167 = vld [vmem:[#allocation5 + $0xe0] sm:$0xff]
    %v168 = vld [vmem:[#allocation5 + $0xe8] sm:$0xff]
    %v169 = vld [vmem:[#allocation5 + $0xf0] sm:$0xff]
    %v170 = vld [vmem:[#allocation5 + $0xf8] sm:$0xff]
    %v171 = vld [vmem:[%s4] sm:$0x3]
    %vm172 = vcmask 523264
    %v173 = vsel %vm172, %v138, 0.0
    %v175 = vlaneseq
    %v176 = vshrl.u32 %v175, 7
    %v177 = vsub.s32 0, %v176
    %v178 = vrot.slane %v171, %v177
    %v179 = vlaneseq
    %v180 = vshrl.u32 %v179, 7
    %v181 = vsub.s32 1, %v180
    %v182 = vrot.slane %v171, %v181
    %185 = vmatprep.subr.mxu0 %v140
    %186 = vmatpush1.msra.mxu0 %v139
    %187 = vmatprep.subr.mxu0 %v142
    %188 = vmatpush1.msra.mxu0 %v141
    %189 = vmatprep.subr.mxu0 %v144
    %190 = vmatpush1.msra.mxu0 %v143
    %191 = vmatprep.subr.mxu0 %v146
    %192 = vmatpush1.msra.mxu0 %v145
    %193 = vmatprep.subr.mxu0 %v148
    %194 = vmatpush1.msra.mxu0 %v147
    %195 = vmatprep.subr.mxu0 %v150
    %196 = vmatpush1.msra.mxu0 %v149
    %197 = vmatprep.subr.mxu0 %v152
    %198 = vmatpush1.msra.mxu0 %v151
    %199 = vmatprep.subr.mxu0 %v154
    %200 = vmatpush1.msra.mxu0 %v153
    %201 = vmatprep.subr.mxu0 %v156
    %202 = vmatpush1.msra.mxu0 %v155
    %203 = vmatprep.subr.mxu0 %v158
    %204 = vmatpush1.msra.mxu0 %v157
    %205 = vmatprep.subr.mxu0 %v160
    %206 = vmatpush1.msra.mxu0 %v159
    %207 = vmatprep.subr.mxu0 %v162
    %208 = vmatpush1.msra.mxu0 %v161
    %209 = vmatprep.subr.mxu0 %v164
    %210 = vmatpush1.msra.mxu0 %v163
    %211 = vmatprep.subr.mxu0 %v166
    %212 = vmatpush1.msra.mxu0 %v165
    %213 = vmatprep.subr.mxu0 %v168
    %214 = vmatpush1.msra.mxu0 %v167
    %215 = vmatprep.subr.mxu0 %v170
    %216 = vmatpush1.msra.mxu0 %v169
    %217 = vmatprep.subr.mxu0 0.0
    %218 = vmatpush1.msra.mxu0 0.0
    %219 = vmatprep.subr.mxu0 0.0
    %220 = vmatpush1.msra.mxu0 0.0
    %221 = vmatprep.subr.mxu0 0.0
    %222 = vmatpush1.msra.mxu0 0.0
    %223 = vmatprep.subr.mxu0 0.0
    %224 = vmatpush1.msra.mxu0 0.0
    %225 = vmatprep.subr.mxu0 0.0
    %226 = vmatpush1.msra.mxu0 0.0
    %227 = vmatprep.subr.mxu0 0.0
    %228 = vmatpush1.msra.mxu0 0.0
    %229 = vmatprep.subr.mxu0 0.0
    %230 = vmatpush1.msra.mxu0 0.0
    %231 = vmatprep.subr.mxu0 0.0
    %232 = vmatpush1.msra.mxu0 0.0
    %233 = vmatprep.subr.mxu0 0.0
    %234 = vmatpush1.msra.mxu0 0.0
    %235 = vmatprep.subr.mxu0 0.0
    %236 = vmatpush1.msra.mxu0 0.0
    %237 = vmatprep.subr.mxu0 0.0
    %238 = vmatpush1.msra.mxu0 0.0
    %239 = vmatprep.subr.mxu0 0.0
    %240 = vmatpush1.msra.mxu0 0.0
    %241 = vmatprep.subr.mxu0 0.0
    %242 = vmatpush1.msra.mxu0 0.0
    %243 = vmatprep.subr.mxu0 0.0
    %244 = vmatpush1.msra.mxu0 0.0
    %245 = vmatprep.subr.mxu0 0.0
    %246 = vmatpush1.msra.mxu0 0.0
    %247 = vmatprep.subr.mxu0 0.0
    %248 = vmatpush1.msra.mxu0 0.0
    %249 = vmatprep.mubr.f32.mxu0 0.0
    %250 = vmatmul.mubr.f32.gmra.mrb[0].mxu0 %v173
    %v251 = vpop.f32.mrb[0].mxu0
    %v252 = vadd.f32 %v178, %v251
    %v253 = vpop.f32.mrb[0].mxu0
    %v254 = vadd.f32 %v182, %v253
    %255 = vdwg.mxu0
    %v256 = vxor.u32 %v252, 2147483648
    %v257 = vmul.f32 %v256, 1.442695
    %v258 = vpow.pop %v257
    %v259 = vadd.f32 %v258, 1.0
    %v260 = vrcp.pop %v259
    %v261 = vmul.f32 1.0, %v260
    %v262 = vxor.u32 %v254, 2147483648
    %v263 = vmul.f32 %v262, 1.442695
    %v264 = vpow.pop %v263
    %v265 = vadd.f32 %v264, 1.0
    %v266 = vrcp.pop %v265
    %v267 = vmul.f32 1.0, %v266
    %v268 = vtanh.pop %v254
    %v269 = vmul.f32 %v261, 0.0
    %271 = vrot.lane.b32.xlu0 %v268, 64
    %v272 = vpop.permute.xlu0 %271
    %v274 = vmul.f32 %v261, %v272
    %276 = vrot.lane.b32.xlu0 %v274, 64
    %v277 = vpop.permute.xlu0 %276
    %v279 = vadd.f32 %v269, %v277
    %v280 = vtanh.pop %v279
    %282 = vrot.lane.b32.xlu0 %v280, 64
    %v283 = vpop.permute.xlu0 %282
    %v285 = vmul.f32 %v267, %v283
    %v286 = vadd.f32 %v285, 0.0
    %v289 = vunpack.c.l.s4 1983009808
    %v290 = vunpack.c.0.s8 %v289
    %v291 = vlaneseq
    %v292 = vshrl.u32 %v291, 7
    %v293 = vsub.s32 %v290, %v292
    %v294 = vrot.slane %v138, %v293
    %295 = vrot.lane.b32.xlu0 %v294, 64
    %v296 = vpop.permute.xlu0 %295
    %299 = vrot.lane.b32.xlu0 %v285, 64
    %v300 = vpop.permute.xlu0 %299
    %v302 = vsel %vm172, %v296, %v300
    %303 = vmatprep.subr.mxu0 %v140
    %304 = vmatpush1.msra.mxu0 %v139
    %305 = vmatprep.subr.mxu0 %v142
    %306 = vmatpush1.msra.mxu0 %v141
    %307 = vmatprep.subr.mxu0 %v144
    %308 = vmatpush1.msra.mxu0 %v143
    %309 = vmatprep.subr.mxu0 %v146
    %310 = vmatpush1.msra.mxu0 %v145
    %311 = vmatprep.subr.mxu0 %v148
    %312 = vmatpush1.msra.mxu0 %v147
    %313 = vmatprep.subr.mxu0 %v150
    %314 = vmatpush1.msra.mxu0 %v149
    %315 = vmatprep.subr.mxu0 %v152
    %316 = vmatpush1.msra.mxu0 %v151
    %317 = vmatprep.subr.mxu0 %v154
    %318 = vmatpush1.msra.mxu0 %v153
    %319 = vmatprep.subr.mxu0 %v156
    %320 = vmatpush1.msra.mxu0 %v155
    %321 = vmatprep.subr.mxu0 %v158
    %322 = vmatpush1.msra.mxu0 %v157
    %323 = vmatprep.subr.mxu0 %v160
    %324 = vmatpush1.msra.mxu0 %v159
    %325 = vmatprep.subr.mxu0 %v162
    %326 = vmatpush1.msra.mxu0 %v161
    %327 = vmatprep.subr.mxu0 %v164
    %328 = vmatpush1.msra.mxu0 %v163
    %329 = vmatprep.subr.mxu0 %v166
    %330 = vmatpush1.msra.mxu0 %v165
    %331 = vmatprep.subr.mxu0 %v168
    %332 = vmatpush1.msra.mxu0 %v167
    %333 = vmatprep.subr.mxu0 %v170
    %334 = vmatpush1.msra.mxu0 %v169
    %335 = vmatprep.subr.mxu0 0.0
    %336 = vmatpush1.msra.mxu0 0.0
    %337 = vmatprep.subr.mxu0 0.0
    %338 = vmatpush1.msra.mxu0 0.0
    %339 = vmatprep.subr.mxu0 0.0
    %340 = vmatpush1.msra.mxu0 0.0
    %341 = vmatprep.subr.mxu0 0.0
    %342 = vmatpush1.msra.mxu0 0.0
    %343 = vmatprep.subr.mxu0 0.0
    %344 = vmatpush1.msra.mxu0 0.0
    %345 = vmatprep.subr.mxu0 0.0
    %346 = vmatpush1.msra.mxu0 0.0
    %347 = vmatprep.subr.mxu0 0.0
    %348 = vmatpush1.msra.mxu0 0.0
    %349 = vmatprep.subr.mxu0 0.0
    %350 = vmatpush1.msra.mxu0 0.0
    %351 = vmatprep.subr.mxu0 0.0
    %352 = vmatpush1.msra.mxu0 0.0
    %353 = vmatprep.subr.mxu0 0.0
    %354 = vmatpush1.msra.mxu0 0.0
    %355 = vmatprep.subr.mxu0 0.0
    %356 = vmatpush1.msra.mxu0 0.0
    %357 = vmatprep.subr.mxu0 0.0
    %358 = vmatpush1.msra.mxu0 0.0
    %359 = vmatprep.subr.mxu0 0.0
    %360 = vmatpush1.msra.mxu0 0.0
    %361 = vmatprep.subr.mxu0 0.0
    %362 = vmatpush1.msra.mxu0 0.0
    %363 = vmatprep.subr.mxu0 0.0
    %364 = vmatpush1.msra.mxu0 0.0
    %365 = vmatprep.subr.mxu0 0.0
    %366 = vmatpush1.msra.mxu0 0.0
    %367 = vmatprep.mubr.f32.mxu0 0.0
    %368 = vmatmul.mubr.f32.gmra.mrb[0].mxu0 %v302
    %v369 = vpop.f32.mrb[0].mxu0
    %v370 = vadd.f32 %v178, %v369
    %v371 = vpop.f32.mrb[0].mxu0
    %v372 = vadd.f32 %v182, %v371
    %373 = vdwg.mxu0
    %v374 = vxor.u32 %v370, 2147483648
    %v375 = vmul.f32 %v374, 1.442695
    %v376 = vpow.pop %v375
    %v377 = vadd.f32 %v376, 1.0
    %v378 = vrcp.pop %v377
    %v379 = vmul.f32 1.0, %v378
    %v380 = vxor.u32 %v372, 2147483648
    %v381 = vmul.f32 %v380, 1.442695
    %v382 = vpow.pop %v381
    %v383 = vadd.f32 %v382, 1.0
    %v384 = vrcp.pop %v383
    %v385 = vmul.f32 1.0, %v384
    %v386 = vtanh.pop %v372
    %v387 = vmul.f32 %v379, %v279
    %389 = vrot.lane.b32.xlu0 %v386, 64
    %v390 = vpop.permute.xlu0 %389
    %v392 = vmul.f32 %v379, %v390
    %394 = vrot.lane.b32.xlu0 %v392, 64
    %v395 = vpop.permute.xlu0 %394
    %v397 = vadd.f32 %v387, %v395
    %v398 = vtanh.pop %v397
    %400 = vrot.lane.b32.xlu0 %v398, 64
    %v401 = vpop.permute.xlu0 %400
    %v403 = vmul.f32 %v385, %v401
    %v404 = vadd.f32 %v286, %v403
    %v405 = vcombine.high %v294, %v294
    %408 = vrot.lane.b32.xlu0 %v403, 64
    %v409 = vpop.permute.xlu0 %408
    %v411 = vsel %vm172, %v405, %v409
    %412 = vmatprep.subr.mxu0 %v140
    %413 = vmatpush1.msra.mxu0 %v139
    %414 = vmatprep.subr.mxu0 %v142
    %415 = vmatpush1.msra.mxu0 %v141
    %416 = vmatprep.subr.mxu0 %v144
    %417 = vmatpush1.msra.mxu0 %v143
    %418 = vmatprep.subr.mxu0 %v146
    %419 = vmatpush1.msra.mxu0 %v145
    %420 = vmatprep.subr.mxu0 %v148
    %421 = vmatpush1.msra.mxu0 %v147
    %422 = vmatprep.subr.mxu0 %v150
    %423 = vmatpush1.msra.mxu0 %v149
    %424 = vmatprep.subr.mxu0 %v152
    %425 = vmatpush1.msra.mxu0 %v151
    %426 = vmatprep.subr.mxu0 %v154
    %427 = vmatpush1.msra.mxu0 %v153
    %428 = vmatprep.subr.mxu0 %v156
    %429 = vmatpush1.msra.mxu0 %v155
    %430 = vmatprep.subr.mxu0 %v158
    %431 = vmatpush1.msra.mxu0 %v157
    %432 = vmatprep.subr.mxu0 %v160
    %433 = vmatpush1.msra.mxu0 %v159
    %434 = vmatprep.subr.mxu0 %v162
    %435 = vmatpush1.msra.mxu0 %v161
    %436 = vmatprep.subr.mxu0 %v164
    %437 = vmatpush1.msra.mxu0 %v163
    %438 = vmatprep.subr.mxu0 %v166
    %439 = vmatpush1.msra.mxu0 %v165
    %440 = vmatprep.subr.mxu0 %v168
    %441 = vmatpush1.msra.mxu0 %v167
    %442 = vmatprep.subr.mxu0 %v170
    %443 = vmatpush1.msra.mxu0 %v169
    %444 = vmatprep.subr.mxu0 0.0
    %445 = vmatpush1.msra.mxu0 0.0
    %446 = vmatprep.subr.mxu0 0.0
    %447 = vmatpush1.msra.mxu0 0.0
    %448 = vmatprep.subr.mxu0 0.0
    %449 = vmatpush1.msra.mxu0 0.0
    %450 = vmatprep.subr.mxu0 0.0
    %451 = vmatpush1.msra.mxu0 0.0
    %452 = vmatprep.subr.mxu0 0.0
    %453 = vmatpush1.msra.mxu0 0.0
    %454 = vmatprep.subr.mxu0 0.0
    %455 = vmatpush1.msra.mxu0 0.0
    %456 = vmatprep.subr.mxu0 0.0
    %457 = vmatpush1.msra.mxu0 0.0
    %458 = vmatprep.subr.mxu0 0.0
    %459 = vmatpush1.msra.mxu0 0.0
    %460 = vmatprep.subr.mxu0 0.0
    %461 = vmatpush1.msra.mxu0 0.0
    %462 = vmatprep.subr.mxu0 0.0
    %463 = vmatpush1.msra.mxu0 0.0
    %464 = vmatprep.subr.mxu0 0.0
    %465 = vmatpush1.msra.mxu0 0.0
    %466 = vmatprep.subr.mxu0 0.0
    %467 = vmatpush1.msra.mxu0 0.0
    %468 = vmatprep.subr.mxu0 0.0
    %469 = vmatpush1.msra.mxu0 0.0
    %470 = vmatprep.subr.mxu0 0.0
    %471 = vmatpush1.msra.mxu0 0.0
    %472 = vmatprep.subr.mxu0 0.0
    %473 = vmatpush1.msra.mxu0 0.0
    %474 = vmatprep.subr.mxu0 0.0
    %475 = vmatpush1.msra.mxu0 0.0
    %476 = vmatprep.mubr.f32.mxu0 0.0
    %477 = vmatmul.mubr.f32.gmra.mrb[0].mxu0 %v411
    %v478 = vpop.f32.mrb[0].mxu0
    %v479 = vadd.f32 %v178, %v478
    %v480 = vpop.f32.mrb[0].mxu0
    %v481 = vadd.f32 %v182, %v480
    %482 = vdwg.mxu0
    %v483 = vxor.u32 %v479, 2147483648
    %v484 = vmul.f32 %v483, 1.442695
    %v485 = vpow.pop %v484
    %v486 = vadd.f32 %v485, 1.0
    %v487 = vrcp.pop %v486
    %v488 = vmul.f32 1.0, %v487
    %v489 = vxor.u32 %v481, 2147483648
    %v490 = vmul.f32 %v489, 1.442695
    %v491 = vpow.pop %v490
    %v492 = vadd.f32 %v491, 1.0
    %v493 = vrcp.pop %v492
    %v494 = vmul.f32 1.0, %v493
    %v495 = vtanh.pop %v481
    %v496 = vmul.f32 %v488, %v397
    %498 = vrot.lane.b32.xlu0 %v495, 64
    %v499 = vpop.permute.xlu0 %498
    %v501 = vmul.f32 %v488, %v499
    %503 = vrot.lane.b32.xlu0 %v501, 64
    %v504 = vpop.permute.xlu0 %503
    %v506 = vadd.f32 %v496, %v504
    %v507 = vtanh.pop %v506
    %509 = vrot.lane.b32.xlu0 %v507, 64
    %v510 = vpop.permute.xlu0 %509
    %v512 = vmul.f32 %v494, %v510
    %v513 = vadd.f32 %v404, %v512
    %514 = vrot.lane.b32.xlu0 %v405, 64
    %v515 = vpop.permute.xlu0 %514
    %518 = vrot.lane.b32.xlu0 %v512, 64
    %v519 = vpop.permute.xlu0 %518
    %v521 = vsel %vm172, %v515, %v519
    %522 = vmatprep.subr.mxu0 %v140
    %523 = vmatpush1.msra.mxu0 %v139
    %524 = vmatprep.subr.mxu0 %v142
    %525 = vmatpush1.msra.mxu0 %v141
    %526 = vmatprep.subr.mxu0 %v144
    %527 = vmatpush1.msra.mxu0 %v143
    %528 = vmatprep.subr.mxu0 %v146
    %529 = vmatpush1.msra.mxu0 %v145
    %530 = vmatprep.subr.mxu0 %v148
    %531 = vmatpush1.msra.mxu0 %v147
    %532 = vmatprep.subr.mxu0 %v150
    %533 = vmatpush1.msra.mxu0 %v149
    %534 = vmatprep.subr.mxu0 %v152
    %535 = vmatpush1.msra.mxu0 %v151
    %536 = vmatprep.subr.mxu0 %v154
    %537 = vmatpush1.msra.mxu0 %v153
    %538 = vmatprep.subr.mxu0 %v156
    %539 = vmatpush1.msra.mxu0 %v155
    %540 = vmatprep.subr.mxu0 %v158
    %541 = vmatpush1.msra.mxu0 %v157
    %542 = vmatprep.subr.mxu0 %v160
    %543 = vmatpush1.msra.mxu0 %v159
    %544 = vmatprep.subr.mxu0 %v162
    %545 = vmatpush1.msra.mxu0 %v161
    %546 = vmatprep.subr.mxu0 %v164
    %547 = vmatpush1.msra.mxu0 %v163
    %548 = vmatprep.subr.mxu0 %v166
    %549 = vmatpush1.msra.mxu0 %v165
    %550 = vmatprep.subr.mxu0 %v168
    %551 = vmatpush1.msra.mxu0 %v167
    %552 = vmatprep.subr.mxu0 %v170
    %553 = vmatpush1.msra.mxu0 %v169
    %554 = vmatprep.subr.mxu0 0.0
    %555 = vmatpush1.msra.mxu0 0.0
    %556 = vmatprep.subr.mxu0 0.0
    %557 = vmatpush1.msra.mxu0 0.0
    %558 = vmatprep.subr.mxu0 0.0
    %559 = vmatpush1.msra.mxu0 0.0
    %560 = vmatprep.subr.mxu0 0.0
    %561 = vmatpush1.msra.mxu0 0.0
    %562 = vmatprep.subr.mxu0 0.0
    %563 = vmatpush1.msra.mxu0 0.0
    %564 = vmatprep.subr.mxu0 0.0
    %565 = vmatpush1.msra.mxu0 0.0
    %566 = vmatprep.subr.mxu0 0.0
    %567 = vmatpush1.msra.mxu0 0.0
    %568 = vmatprep.subr.mxu0 0.0
    %569 = vmatpush1.msra.mxu0 0.0
    %570 = vmatprep.subr.mxu0 0.0
    %571 = vmatpush1.msra.mxu0 0.0
    %572 = vmatprep.subr.mxu0 0.0
    %573 = vmatpush1.msra.mxu0 0.0
    %574 = vmatprep.subr.mxu0 0.0
    %575 = vmatpush1.msra.mxu0 0.0
    %576 = vmatprep.subr.mxu0 0.0
    %577 = vmatpush1.msra.mxu0 0.0
    %578 = vmatprep.subr.mxu0 0.0
    %579 = vmatpush1.msra.mxu0 0.0
    %580 = vmatprep.subr.mxu0 0.0
    %581 = vmatpush1.msra.mxu0 0.0
    %582 = vmatprep.subr.mxu0 0.0
    %583 = vmatpush1.msra.mxu0 0.0
    %584 = vmatprep.subr.mxu0 0.0
    %585 = vmatpush1.msra.mxu0 0.0
    %586 = vmatprep.mubr.f32.mxu0 0.0
    %587 = vmatmul.mubr.f32.gmra.mrb[0].mxu0 %v521
    %v588 = vpop.f32.mrb[0].mxu0
    %v589 = vadd.f32 %v178, %v588
    %v590 = vpop.f32.mrb[0].mxu0
    %v591 = vadd.f32 %v182, %v590
    %592 = vdwg.mxu0
    %v593 = vxor.u32 %v589, 2147483648
    %v594 = vmul.f32 %v593, 1.442695
    %v595 = vpow.pop %v594
    %v596 = vadd.f32 %v595, 1.0
    %v597 = vrcp.pop %v596
    %v598 = vmul.f32 1.0, %v597
    %v599 = vxor.u32 %v591, 2147483648
    %v600 = vmul.f32 %v599, 1.442695
    %v601 = vpow.pop %v600
    %v602 = vadd.f32 %v601, 1.0
    %v603 = vrcp.pop %v602
    %v604 = vmul.f32 1.0, %v603
    %v605 = vtanh.pop %v591
    %v606 = vmul.f32 %v598, %v506
    %608 = vrot.lane.b32.xlu0 %v605, 64
    %v609 = vpop.permute.xlu0 %608
    %v611 = vmul.f32 %v598, %v609
    %613 = vrot.lane.b32.xlu0 %v611, 64
    %v614 = vpop.permute.xlu0 %613
    %v616 = vadd.f32 %v606, %v614
    %v617 = vtanh.pop %v616
    %619 = vrot.lane.b32.xlu0 %v617, 64
    %v620 = vpop.permute.xlu0 %619
    %v622 = vmul.f32 %v604, %v620
    %v623 = vadd.f32 %v513, %v622
    %v624 = vmul.f32 %v623, 0.25
    %v625 = vcombine.high %v138, %v138
    %v627 = vunpack.c.l.s4 1983009808
    %v628 = vunpack.c.0.s8 %v627
    %v629 = vlaneseq
    %v630 = vshrl.u32 %v629, 7
    %v631 = vsub.s32 %v628, %v630
    %v632 = vrot.slane %v625, %v631
    %633 = vrot.lane.b32.xlu0 %v632, 56
    %v634 = vpop.permute.xlu0 %633
    %636 = vrot.lane.b32.xlu0 %v632, 64
    %v637 = vpop.permute.xlu0 %636
    %vm639 = vcmask 64512
    %v640 = vsel %vm639, %v634, %v637
    %641 = vrot.lane.b32.xlu0 %v138, 48
    %v642 = vpop.permute.xlu0 %641
    %v643 = vrot.slane %v642, 4
    %v645 = vsub.f32 %v643, %v640
    %v648 = vunpack.c.l.s4 1983009808
    %v649 = vunpack.c.0.s8 %v648
    %v650 = vlaneseq
    %v651 = vshrl.u32 %v650, 7
    %v652 = vsub.s32 %v649, %v651
    %v653 = vrot.slane %v645, %v652
    %654 = vrot.lane.b32.xlu0 %v653, 8
    %v655 = vpop.permute.xlu0 %654
    %v657 = vsel %vm639, %v634, %v655
    %v658 = vld [vmem:[%s5] sm:$0x1]
    %v659 = vld [vmem:[%s6] sm:$0x1]
    %vm660 = vcmask 58368
    %v661 = vsel %vm660, %v657, 0.0
    %662 = vadd.xlane.f32.xlu0 %v661
    %v663 = vpop.xlane.xlu0 %662
    %v664 = vrcp.pop 8.0
    %v665 = vmul.f32 %v663, %v664
    %v666 = vsub.f32 %v657, %v665
    %v667 = vmul.f32 %v666, %v666
    %v668 = vsel %vm660, %v667, 0.0
    %669 = vadd.xlane.f32.xlu0 %v668
    %v670 = vpop.xlane.xlu0 %669
    %v671 = vmul.f32 %v670, %v664
    %v672 = vadd.f32 %v671, 1e-05
    %v673 = vrsqrt.pop %v672
    %v674 = vmul.f32 %v666, %v673
    %676 = vrot.lane.b32.xlu0 %v657, 120
    %v677 = vpop.permute.xlu0 %676
    %vm679 = vcmask 123904
    %v680 = vsel %vm679, %v677, 0.0
    %681 = vadd.xlane.f32.xlu0 %v680
    %v682 = vpop.xlane.xlu0 %681
    %v683 = vrcp.pop 16.0
    %v684 = vmul.f32 %v682, %v683
    %v685 = vsub.f32 %v657, %v684
    %v686 = vmul.f32 %v685, %v685
    %688 = vrot.lane.b32.xlu0 %v686, 120
    %v689 = vpop.permute.xlu0 %688
    %v691 = vsel %vm679, %v689, 0.0
    %692 = vadd.xlane.f32.xlu0 %v691
    %v693 = vpop.xlane.xlu0 %692
    %v694 = vmul.f32 %v693, %v683
    %v695 = vadd.f32 %v694, 1e-05
    %v696 = vrsqrt.pop %v695
    %v697 = vmul.f32 %v685, %v696
    %v698 = vsel %vm639, %v674, %v697
    %v700 = vlaneseq
    %v701 = vshrl.u32 %v700, 7
    %v702 = vsub.s32 0, %v701
    %v703 = vrot.slane %v658, %v702
    %v705 = vmul.f32 %v698, %v703
    %v707 = vlaneseq
    %v708 = vshrl.u32 %v707, 7
    %v709 = vsub.s32 0, %v708
    %v710 = vrot.slane %v659, %v709
    %v712 = vadd.f32 %v705, %v710
    %v713 = vld [vmem:[#allocation7] sm:$0xff]
    %v714 = vld [vmem:[#allocation7 + $0x8] sm:$0xff]
    %v715 = vld [vmem:[#allocation7 + $0x10] sm:$0xff]
    %v716 = vld [vmem:[%s8] sm:$0x1]
    %v718 = vlaneseq
    %v719 = vshrl.u32 %v718, 7
    %v720 = vsub.s32 0, %v719
    %v721 = vrot.slane %v716, %v720
    %vm723 = vcmask 195584
    %v725 = vsel %vm723, %v712, 0
    %727 = vmatprep.subr.mxu0 0.0
    %728 = vmatpush1.msra.mxu0 %v713
    %729 = vmatprep.subr.mxu0 0.0
    %730 = vmatpush1.msra.mxu0 %v714
    %731 = vmatprep.subr.mxu0 0.0
    %732 = vmatpush1.msra.mxu0 %v715
    %733 = vmatprep.subr.mxu0 0.0
    %734 = vmatpush1.msra.mxu0 0.0
    %735 = vmatprep.subr.mxu0 0.0
    %736 = vmatpush1.msra.mxu0 0.0
    %737 = vmatprep.subr.mxu0 0.0
    %738 = vmatpush1.msra.mxu0 0.0
    %739 = vmatprep.subr.mxu0 0.0
    %740 = vmatpush1.msra.mxu0 0.0
    %741 = vmatprep.subr.mxu0 0.0
    %742 = vmatpush1.msra.mxu0 0.0
    %743 = vmatprep.subr.mxu0 0.0
    %744 = vmatpush1.msra.mxu0 0.0
    %745 = vmatprep.subr.mxu0 0.0
    %746 = vmatpush1.msra.mxu0 0.0
    %747 = vmatprep.subr.mxu0 0.0
    %748 = vmatpush1.msra.mxu0 0.0
    %749 = vmatprep.subr.mxu0 0.0
    %750 = vmatpush1.msra.mxu0 0.0
    %751 = vmatprep.subr.mxu0 0.0
    %752 = vmatpush1.msra.mxu0 0.0
    %753 = vmatprep.subr.mxu0 0.0
    %754 = vmatpush1.msra.mxu0 0.0
    %755 = vmatprep.subr.mxu0 0.0
    %756 = vmatpush1.msra.mxu0 0.0
    %757 = vmatprep.subr.mxu0 0.0
    %758 = vmatpush1.msra.mxu0 0.0
    %759 = vmatprep.subr.mxu0 0.0
    %760 = vmatpush1.msra.mxu0 0.0
    %761 = vmatprep.subr.mxu0 0.0
    %762 = vmatpush1.msra.mxu0 0.0
    %763 = vmatprep.subr.mxu0 0.0
    %764 = vmatpush1.msra.mxu0 0.0
    %765 = vmatprep.subr.mxu0 0.0
    %766 = vmatpush1.msra.mxu0 0.0
    %767 = vmatprep.subr.mxu0 0.0
    %768 = vmatpush1.msra.mxu0 0.0
    %769 = vmatprep.subr.mxu0 0.0
    %770 = vmatpush1.msra.mxu0 0.0
    %771 = vmatprep.subr.mxu0 0.0
    %772 = vmatpush1.msra.mxu0 0.0
    %773 = vmatprep.subr.mxu0 0.0
    %774 = vmatpush1.msra.mxu0 0.0
    %775 = vmatprep.subr.mxu0 0.0
    %776 = vmatpush1.msra.mxu0 0.0
    %777 = vmatprep.subr.mxu0 0.0
    %778 = vmatpush1.msra.mxu0 0.0
    %779 = vmatprep.subr.mxu0 0.0
    %780 = vmatpush1.msra.mxu0 0.0
    %781 = vmatprep.subr.mxu0 0.0
    %782 = vmatpush1.msra.mxu0 0.0
    %783 = vmatprep.subr.mxu0 0.0
    %784 = vmatpush1.msra.mxu0 0.0
    %785 = vmatprep.subr.mxu0 0.0
    %786 = vmatpush1.msra.mxu0 0.0
    %787 = vmatprep.subr.mxu0 0.0
    %788 = vmatpush1.msra.mxu0 0.0
    %789 = vmatprep.subr.mxu0 0.0
    %790 = vmatpush1.msra.mxu0 0.0
    %791 = vmatprep.mubr.f32.mxu0 0.0
    %792 = vmatmul.mubr.f32.gmra.mrb[0].mxu0 %v725
    %v793 = vpop.f32.mrb[0].mxu0
    %v794 = vadd.f32 %v721, %v793
    %v795 = vpop.f32.mrb[0].mxu0
    %796 = vdwg.mxu0
    %v797 = vmax.f32 %v794, 0.0
    %v798 = vld [vmem:[%s9] sm:$0x1]
    %v799 = vld [vmem:[%s10] sm:$0x1]
    %vm800 = vcmask 254976
    %v801 = vsel %vm800, %v797, 0.0
    %802 = vadd.xlane.f32.xlu0 %v801
    %v803 = vpop.xlane.xlu0 %802
    %v804 = vrcp.pop 32.0
    %v805 = vmul.f32 %v803, %v804
    %v806 = vsub.f32 %v797, %v805
    %v807 = vmul.f32 %v806, %v806
    %v808 = vsel %vm800, %v807, 0.0
    %809 = vadd.xlane.f32.xlu0 %v808
    %v810 = vpop.xlane.xlu0 %809
    %v811 = vmul.f32 %v810, %v804
    %v812 = vadd.f32 %v811, 1e-05
    %v813 = vrsqrt.pop %v812
    %v814 = vmul.f32 %v806, %v813
    %816 = vrot.lane.b32.xlu0 %v797, 96
    %v817 = vpop.permute.xlu0 %816
    %v819 = vsel %vm800, %v817, 0.0
    %820 = vadd.xlane.f32.xlu0 %v819
    %v821 = vpop.xlane.xlu0 %820
    %v822 = vmul.f32 %v821, %v804
    %v823 = vsub.f32 %v797, %v822
    %v824 = vmul.f32 %v823, %v823
    %826 = vrot.lane.b32.xlu0 %v824, 96
    %v827 = vpop.permute.xlu0 %826
    %v829 = vsel %vm800, %v827, 0.0
    %830 = vadd.xlane.f32.xlu0 %v829
    %v831 = vpop.xlane.xlu0 %830
    %v832 = vmul.f32 %v831, %v804
    %v833 = vadd.f32 %v832, 1e-05
    %v834 = vrsqrt.pop %v833
    %v835 = vmul.f32 %v823, %v834
    %vm836 = vcmask 261120
    %v837 = vsel %vm836, %v814, %v835
    %v839 = vlaneseq
    %v840 = vshrl.u32 %v839, 7
    %v841 = vsub.s32 0, %v840
    %v842 = vrot.slane %v798, %v841
    %v844 = vmul.f32 %v837, %v842
    %v846 = vlaneseq
    %v847 = vshrl.u32 %v846, 7
    %v848 = vsub.s32 0, %v847
    %v849 = vrot.slane %v799, %v848
    %v851 = vadd.f32 %v844, %v849
    %v852 = vld [vmem:[%s11] sm:$0xff]
    %v853 = vld [vmem:[%s11 + $0x8] sm:$0xff]
    %v854 = vld [vmem:[%s11 + $0x10] sm:$0xff]
    %v855 = vld [vmem:[%s11 + $0x18] sm:$0xff]
    %v856 = vld [vmem:[%s11 + $0x20] sm:$0xff]
    %v857 = vld [vmem:[%s11 + $0x28] sm:$0xff]
    %v858 = vld [vmem:[%s11 + $0x30] sm:$0xff]
    %v859 = vld [vmem:[%s11 + $0x38] sm:$0xff]
    %v860 = vld [vmem:[%s12] sm:$0x1]
    %v862 = vlaneseq
    %v863 = vshrl.u32 %v862, 7
    %v864 = vsub.s32 0, %v863
    %v865 = vrot.slane %v860, %v864
    %v868 = vsel %vm172, %v851, 0
    %870 = vmatprep.subr.mxu0 0.0
    %871 = vmatpush1.msra.mxu0 %v852
    %872 = vmatprep.subr.mxu0 0.0
    %873 = vmatpush1.msra.mxu0 %v853
    %874 = vmatprep.subr.mxu0 0.0
    %875 = vmatpush1.msra.mxu0 %v854
    %876 = vmatprep.subr.mxu0 0.0
    %877 = vmatpush1.msra.mxu0 %v855
    %878 = vmatprep.subr.mxu0 0.0
    %879 = vmatpush1.msra.mxu0 %v856
    %880 = vmatprep.subr.mxu0 0.0
    %881 = vmatpush1.msra.mxu0 %v857
    %882 = vmatprep.subr.mxu0 0.0
    %883 = vmatpush1.msra.mxu0 %v858
    %884 = vmatprep.subr.mxu0 0.0
    %885 = vmatpush1.msra.mxu0 %v859
    %886 = vmatprep.subr.mxu0 0.0
    %887 = vmatpush1.msra.mxu0 0.0
    %888 = vmatprep.subr.mxu0 0.0
    %889 = vmatpush1.msra.mxu0 0.0
    %890 = vmatprep.subr.mxu0 0.0
    %891 = vmatpush1.msra.mxu0 0.0
    %892 = vmatprep.subr.mxu0 0.0
    %893 = vmatpush1.msra.mxu0 0.0
    %894 = vmatprep.subr.mxu0 0.0
    %895 = vmatpush1.msra.mxu0 0.0
    %896 = vmatprep.subr.mxu0 0.0
    %897 = vmatpush1.msra.mxu0 0.0
    %898 = vmatprep.subr.mxu0 0.0
    %899 = vmatpush1.msra.mxu0 0.0
    %900 = vmatprep.subr.mxu0 0.0
    %901 = vmatpush1.msra.mxu0 0.0
    %902 = vmatprep.subr.mxu0 0.0
    %903 = vmatpush1.msra.mxu0 0.0
    %904 = vmatprep.subr.mxu0 0.0
    %905 = vmatpush1.msra.mxu0 0.0
    %906 = vmatprep.subr.mxu0 0.0
    %907 = vmatpush1.msra.mxu0 0.0
    %908 = vmatprep.subr.mxu0 0.0
    %909 = vmatpush1.msra.mxu0 0.0
    %910 = vmatprep.subr.mxu0 0.0
    %911 = vmatpush1.msra.mxu0 0.0
    %912 = vmatprep.subr.mxu0 0.0
    %913 = vmatpush1.msra.mxu0 0.0
    %914 = vmatprep.subr.mxu0 0.0
    %915 = vmatpush1.msra.mxu0 0.0
    %916 = vmatprep.subr.mxu0 0.0
    %917 = vmatpush1.msra.mxu0 0.0
    %918 = vmatprep.subr.mxu0 0.0
    %919 = vmatpush1.msra.mxu0 0.0
    %920 = vmatprep.subr.mxu0 0.0
    %921 = vmatpush1.msra.mxu0 0.0
    %922 = vmatprep.subr.mxu0 0.0
    %923 = vmatpush1.msra.mxu0 0.0
    %924 = vmatprep.subr.mxu0 0.0
    %925 = vmatpush1.msra.mxu0 0.0
    %926 = vmatprep.subr.mxu0 0.0
    %927 = vmatpush1.msra.mxu0 0.0
    %928 = vmatprep.subr.mxu0 0.0
    %929 = vmatpush1.msra.mxu0 0.0
    %930 = vmatprep.subr.mxu0 0.0
    %931 = vmatpush1.msra.mxu0 0.0
    %932 = vmatprep.subr.mxu0 0.0
    %933 = vmatpush1.msra.mxu0 0.0
    %934 = vmatprep.mubr.f32.mxu0 0.0
    %935 = vmatmul.mubr.f32.gmra.mrb[0].mxu0 %v868
    %v936 = vpop.f32.mrb[0].mxu0
    %v937 = vadd.f32 %v865, %v936
    %v938 = vpop.f32.mrb[0].mxu0
    %939 = vdwg.mxu0
    %v940 = vmax.f32 %v937, 0.0
    %v941 = vld [vmem:[%s13] sm:$0x1]
    %v942 = vld [vmem:[%s14] sm:$0x1]
    %v943 = vsel %vm800, %v940, 0.0
    %944 = vadd.xlane.f32.xlu0 %v943
    %v945 = vpop.xlane.xlu0 %944
    %v946 = vmul.f32 %v945, %v804
    %v947 = vsub.f32 %v940, %v946
    %v948 = vmul.f32 %v947, %v947
    %v949 = vsel %vm800, %v948, 0.0
    %950 = vadd.xlane.f32.xlu0 %v949
    %v951 = vpop.xlane.xlu0 %950
    %v952 = vmul.f32 %v951, %v804
    %v953 = vadd.f32 %v952, 1e-05
    %v954 = vrsqrt.pop %v953
    %v955 = vmul.f32 %v947, %v954
    %957 = vrot.lane.b32.xlu0 %v940, 96
    %v958 = vpop.permute.xlu0 %957
    %v960 = vsel %vm800, %v958, 0.0
    %961 = vadd.xlane.f32.xlu0 %v960
    %v962 = vpop.xlane.xlu0 %961
    %v963 = vmul.f32 %v962, %v804
    %v964 = vsub.f32 %v940, %v963
    %v965 = vmul.f32 %v964, %v964
    %967 = vrot.lane.b32.xlu0 %v965, 96
    %v968 = vpop.permute.xlu0 %967
    %v970 = vsel %vm800, %v968, 0.0
    %971 = vadd.xlane.f32.xlu0 %v970
    %v972 = vpop.xlane.xlu0 %971
    %v973 = vmul.f32 %v972, %v804
    %v974 = vadd.f32 %v973, 1e-05
    %v975 = vrsqrt.pop %v974
    %v976 = vmul.f32 %v964, %v975
    %v977 = vsel %vm836, %v955, %v976
    %v979 = vlaneseq
    %v980 = vshrl.u32 %v979, 7
    %v981 = vsub.s32 0, %v980
    %v982 = vrot.slane %v941, %v981
    %v984 = vmul.f32 %v977, %v982
    %v986 = vlaneseq
    %v987 = vshrl.u32 %v986, 7
    %v988 = vsub.s32 0, %v987
    %v989 = vrot.slane %v942, %v988
    %v991 = vadd.f32 %v984, %v989
    %v992 = vld [vmem:[%s1] sm:$0x1]
    %v993 = vld [vmem:[%s1 + $0x1] sm:$0x1]
    %v994 = vld [vmem:[%s2] sm:$0x3]
    %996 = vset.pattern.permute.xlu0 0
    %997 = vperm.xlu0 %996, %v994
    %v998 = vpop.permute.xlu0 %997
    %v999 = vlaneseq
    %v1000 = vshrl.u32 %v999, 7
    %v1001 = vsub.s32 0, %v1000
    %v1002 = vrot.slane %v998, %v1001
    %v1003 = vlaneseq
    %v1004 = vshrl.u32 %v1003, 7
    %v1005 = vsub.s32 1, %v1004
    %v1006 = vrot.slane %v998, %v1005
    %v1009 = vmul.f32 %v992, %v1002
    %v1010 = vmul.f32 %v993, %v1006
    %1012 = vrot.lane.b32.xlu0 %v991, 64
    %v1013 = vpop.permute.xlu0 %1012
    %v1015 = vsel %vm172, %v624, %v1013
    %v1018 = vcombine.low %v1009, %v1010
    %v1020 = vunpack.c.l.s4 1966171168
    %v1021 = vunpack.c.0.s8 %v1020
    %v1022 = vlaneseq
    %v1023 = vshrl.u32 %v1022, 7
    %v1024 = vsub.s32 %v1021, %v1023
    %v1025 = vrot.slane %v1018, %v1024
    %v1027 = vunpack.c.l.s4 1966171168
    %v1028 = vunpack.c.0.s8 %v1027
    %v1029 = vlaneseq
    %v1030 = vshrl.u32 %v1029, 7
    %v1031 = vsub.s32 %v1028, %v1030
    %v1032 = vrot.slane %v1025, %v1031
    %v1033 = vld [vmem:[#allocation8] sm:$0xff]
    %v1034 = vld [vmem:[#allocation8 + $0x8] sm:$0xff]
    %v1035 = vld [vmem:[#allocation8 + $0x10] sm:$0xff]
    %v1036 = vld [vmem:[#allocation8 + $0x18] sm:$0xff]
    %v1037 = vld [vmem:[#allocation8 + $0x20] sm:$0xff]
    %v1038 = vld [vmem:[#allocation8 + $0x28] sm:$0xff]
    %v1039 = vld [vmem:[#allocation8 + $0x30] sm:$0xff]
    %v1040 = vld [vmem:[#allocation8 + $0x38] sm:$0xff]
    %v1041 = vld [vmem:[#allocation8 + $0x40] sm:$0xff]
    %v1042 = vld [vmem:[#allocation8 + $0x48] sm:$0xff]
    %v1043 = vld [vmem:[#allocation8 + $0x50] sm:$0xff]
    %v1044 = vld [vmem:[#allocation8 + $0x58] sm:$0xff]
    %v1045 = vld [vmem:[#allocation8 + $0x60] sm:$0xff]
    %v1046 = vld [vmem:[#allocation8 + $0x68] sm:$0xff]
    %v1047 = vld [vmem:[#allocation8 + $0x70] sm:$0xff]
    %v1048 = vld [vmem:[#allocation8 + $0x78] sm:$0xff]
    %v1049 = vld [vmem:[#allocation8 + $0x80] sm:$0xff]
    %v1050 = vld [vmem:[#allocation8 + $0x88] sm:$0xff]
    %v1051 = vld [vmem:[#allocation8 + $0x90] sm:$0xff]
    %v1052 = vld [vmem:[#allocation8 + $0x98] sm:$0xff]
    %v1053 = vld [vmem:[%s16] sm:$0x1]
    %v1055 = vlaneseq
    %v1056 = vshrl.u32 %v1055, 7
    %v1057 = vsub.s32 0, %v1056
    %v1058 = vrot.slane %v1053, %v1057
    %v1060 = vsel %vm836, %v1032, 0
    %1062 = vmatprep.subr.mxu0 0.0
    %1063 = vmatpush1.msra.mxu0 %v1033
    %1064 = vmatprep.subr.mxu0 0.0
    %1065 = vmatpush1.msra.mxu0 %v1034
    %1066 = vmatprep.subr.mxu0 0.0
    %1067 = vmatpush1.msra.mxu0 %v1035
    %1068 = vmatprep.subr.mxu0 0.0
    %1069 = vmatpush1.msra.mxu0 %v1036
    %1070 = vmatprep.subr.mxu0 0.0
    %1071 = vmatpush1.msra.mxu0 %v1037
    %1072 = vmatprep.subr.mxu0 0.0
    %1073 = vmatpush1.msra.mxu0 %v1038
    %1074 = vmatprep.subr.mxu0 0.0
    %1075 = vmatpush1.msra.mxu0 %v1039
    %1076 = vmatprep.subr.mxu0 0.0
    %1077 = vmatpush1.msra.mxu0 %v1040
    %1078 = vmatprep.subr.mxu0 0.0
    %1079 = vmatpush1.msra.mxu0 %v1041
    %1080 = vmatprep.subr.mxu0 0.0
    %1081 = vmatpush1.msra.mxu0 %v1042
    %1082 = vmatprep.subr.mxu0 0.0
    %1083 = vmatpush1.msra.mxu0 %v1043
    %1084 = vmatprep.subr.mxu0 0.0
    %1085 = vmatpush1.msra.mxu0 %v1044
    %1086 = vmatprep.subr.mxu0 0.0
    %1087 = vmatpush1.msra.mxu0 %v1045
    %1088 = vmatprep.subr.mxu0 0.0
    %1089 = vmatpush1.msra.mxu0 %v1046
    %1090 = vmatprep.subr.mxu0 0.0
    %1091 = vmatpush1.msra.mxu0 %v1047
    %1092 = vmatprep.subr.mxu0 0.0
    %1093 = vmatpush1.msra.mxu0 %v1048
    %1094 = vmatprep.subr.mxu0 0.0
    %1095 = vmatpush1.msra.mxu0 %v1049
    %1096 = vmatprep.subr.mxu0 0.0
    %1097 = vmatpush1.msra.mxu0 %v1050
    %1098 = vmatprep.subr.mxu0 0.0
    %1099 = vmatpush1.msra.mxu0 %v1051
    %1100 = vmatprep.subr.mxu0 0.0
    %1101 = vmatpush1.msra.mxu0 %v1052
    %1102 = vmatprep.subr.mxu0 0.0
    %1103 = vmatpush1.msra.mxu0 0.0
    %1104 = vmatprep.subr.mxu0 0.0
    %1105 = vmatpush1.msra.mxu0 0.0
    %1106 = vmatprep.subr.mxu0 0.0
    %1107 = vmatpush1.msra.mxu0 0.0
    %1108 = vmatprep.subr.mxu0 0.0
    %1109 = vmatpush1.msra.mxu0 0.0
    %1110 = vmatprep.subr.mxu0 0.0
    %1111 = vmatpush1.msra.mxu0 0.0
    %1112 = vmatprep.subr.mxu0 0.0
    %1113 = vmatpush1.msra.mxu0 0.0
    %1114 = vmatprep.subr.mxu0 0.0
    %1115 = vmatpush1.msra.mxu0 0.0
    %1116 = vmatprep.subr.mxu0 0.0
    %1117 = vmatpush1.msra.mxu0 0.0
    %1118 = vmatprep.subr.mxu0 0.0
    %1119 = vmatpush1.msra.mxu0 0.0
    %1120 = vmatprep.subr.mxu0 0.0
    %1121 = vmatpush1.msra.mxu0 0.0
    %1122 = vmatprep.subr.mxu0 0.0
    %1123 = vmatpush1.msra.mxu0 0.0
    %1124 = vmatprep.subr.mxu0 0.0
    %1125 = vmatpush1.msra.mxu0 0.0
    %1126 = vmatprep.mubr.f32.mxu0 %v1060
    %1127 = vmatmul.mubr.f32.gmra.mrb[0].mxu0 %v1015
    %v1128 = vpop.f32.mrb[0].mxu0
    %v1129 = vadd.f32 %v1058, %v1128
    %v1130 = vpop.f32.mrb[0].mxu0
    %1131 = vdwg.mxu0
    %v1132 = vxor.u32 %v1129, 2147483648
    %v1133 = vmul.f32 %v1132, 1.442695
    %v1134 = vpow.pop %v1133
    %v1135 = vadd.f32 %v1134, 1.0
    %v1136 = vrcp.pop %v1135
    %v1137 = vmul.f32 1.0, %v1136
    %1139 = vrot.lane.b32.xlu0 %v1129, 32
    %v1140 = vpop.permute.xlu0 %1139
    %v1142 = vmul.f32 %v1137, %v1140
    %1144 = vrot.lane.b32.xlu0 %v1142, 64
    %v1145 = vpop.permute.xlu0 %1144
    %v1147 = vadd.f32 %v1129, %v1145
    %v1148 = vtanh.pop %v1147
    %v1149 = vsub.f32 1.0, %v1137
    %1151 = vrot.lane.b32.xlu0 %v1148, 96
    %v1152 = vpop.permute.xlu0 %1151
    %v1154 = vmul.f32 %v1149, %v1152
    %1155 = vrot.lane.b32.xlu0 %v1032, 32
    %v1156 = vpop.permute.xlu0 %1155
    %v1158 = vmul.f32 %v1137, %v1156
    %v1159 = vadd.f32 %v1154, %v1158
    %v1162 = vunpack.c.l.s4 1966171168
    %v1163 = vunpack.c.0.s8 %v1162
    %v1164 = vlaneseq
    %v1165 = vshrl.u32 %v1164, 7
    %v1166 = vsub.s32 %v1163, %v1165
    %v1167 = vrot.slane %v1159, %v1166
    %v1168 = vcombine.high %v1167, %v1167
    %v1170 = vunpack.c.l.s4 1966171168
    %v1171 = vunpack.c.0.s8 %v1170
    %v1172 = vlaneseq
    %v1173 = vshrl.u32 %v1172, 7
    %v1174 = vsub.s32 %v1171, %v1173
    %v1175 = vrot.slane %v1167, %v1174
    %v1177 = vunpack.c.l.s4 1966171168
    %v1178 = vunpack.c.0.s8 %v1177
    %v1179 = vlaneseq
    %v1180 = vshrl.u32 %v1179, 7
    %v1181 = vsub.s32 %v1178, %v1180
    %v1182 = vrot.slane %v1168, %v1181
    %v1183 = vlaneseq
    %v1184 = vshrl.u32 %v1183, 7
    %v1185 = vsub.s32 0, %v1184
    %v1186 = vrot.slane %v1175, %v1185
    %v1187 = vlaneseq
    %v1188 = vshrl.u32 %v1187, 7
    %v1189 = vsub.s32 0, %v1188
    %v1190 = vrot.slane %v1182, %v1189
    %1191 = vrot.lane.b32.xlu0 %v1186, 96
    %v1192 = vpop.permute.xlu0 %1191
    %1193 = vrot.lane.b32.xlu0 %v1190, 96
    %v1194 = vpop.permute.xlu0 %1193
    %vm1197 = vcmask 253952
    %1198 = vst.msk [vmem:[%s22] sm:$0x1] %vm1197, %v1192
    %1199 = vst.msk [vmem:[%s22 + $0x1] sm:$0x1] %vm1197, %v1194
    %v1200 = vld [vmem:[%s17] sm:$0x1]
    %v1201 = vld [vmem:[%s18] sm:$0x1]
    %1202 = vrot.lane.b32.xlu0 %v1159, 96
    %v1203 = vpop.permute.xlu0 %1202
    %v1205 = vsel %vm800, %v1203, 0.0
    %1206 = vadd.xlane.f32.xlu0 %v1205
    %v1207 = vpop.xlane.xlu0 %1206
    %v1208 = vmul.f32 %v1207, %v804
    %v1209 = vsub.f32 %v1159, %v1208
    %v1210 = vmul.f32 %v1209, %v1209
    %1212 = vrot.lane.b32.xlu0 %v1210, 96
    %v1213 = vpop.permute.xlu0 %1212
    %v1215 = vsel %vm800, %v1213, 0.0
    %1216 = vadd.xlane.f32.xlu0 %v1215
    %v1217 = vpop.xlane.xlu0 %1216
    %v1218 = vmul.f32 %v1217, %v804
    %v1219 = vadd.f32 %v1218, 1e-05
    %v1220 = vrsqrt.pop %v1219
    %v1221 = vmul.f32 %v1209, %v1220
    %v1223 = vlaneseq
    %v1224 = vshrl.u32 %v1223, 7
    %v1225 = vsub.s32 0, %v1224
    %v1226 = vrot.slane %v1200, %v1225
    %1227 = vrot.lane.b32.xlu0 %v1226, 32
    %v1228 = vpop.permute.xlu0 %1227
    %v1230 = vmul.f32 %v1221, %v1228
    %v1232 = vlaneseq
    %v1233 = vshrl.u32 %v1232, 7
    %v1234 = vsub.s32 0, %v1233
    %v1235 = vrot.slane %v1201, %v1234
    %1236 = vrot.lane.b32.xlu0 %v1235, 32
    %v1237 = vpop.permute.xlu0 %1236
    %v1239 = vadd.f32 %v1230, %v1237
    %v1240 = vld [vmem:[#allocation10] sm:$0xff]
    %v1241 = vld [vmem:[#allocation10 + $0x8] sm:$0xff]
    %v1242 = vld [vmem:[#allocation10 + $0x10] sm:$0xff]
    %v1243 = vld [vmem:[#allocation10 + $0x18] sm:$0xff]
    %v1244 = vld [vmem:[#allocation2] sm:$0x1]
    %v1246 = vlaneseq
    %v1247 = vshrl.u32 %v1246, 7
    %v1248 = vsub.s32 0, %v1247
    %v1249 = vrot.slane %v1244, %v1248
    %1252 = vrot.lane.b32.xlu0 %v1239, 96
    %v1253 = vpop.permute.xlu0 %1252
    %v1254 = vsel %vm836, %v1253, 0
    %1256 = vmatprep.subr.mxu0 0.0
    %1257 = vmatpush1.msra.mxu0 %v1240
    %1258 = vmatprep.subr.mxu0 0.0
    %1259 = vmatpush1.msra.mxu0 %v1241
    %1260 = vmatprep.subr.mxu0 0.0
    %1261 = vmatpush1.msra.mxu0 %v1242
    %1262 = vmatprep.subr.mxu0 0.0
    %1263 = vmatpush1.msra.mxu0 %v1243
    %1264 = vmatprep.subr.mxu0 0.0
    %1265 = vmatpush1.msra.mxu0 0.0
    %1266 = vmatprep.subr.mxu0 0.0
    %1267 = vmatpush1.msra.mxu0 0.0
    %1268 = vmatprep.subr.mxu0 0.0
    %1269 = vmatpush1.msra.mxu0 0.0
    %1270 = vmatprep.subr.mxu0 0.0
    %1271 = vmatpush1.msra.mxu0 0.0
    %1272 = vmatprep.subr.mxu0 0.0
    %1273 = vmatpush1.msra.mxu0 0.0
    %1274 = vmatprep.subr.mxu0 0.0
    %1275 = vmatpush1.msra.mxu0 0.0
    %1276 = vmatprep.subr.mxu0 0.0
    %1277 = vmatpush1.msra.mxu0 0.0
    %1278 = vmatprep.subr.mxu0 0.0
    %1279 = vmatpush1.msra.mxu0 0.0
    %1280 = vmatprep.subr.mxu0 0.0
    %1281 = vmatpush1.msra.mxu0 0.0
    %1282 = vmatprep.subr.mxu0 0.0
    %1283 = vmatpush1.msra.mxu0 0.0
    %1284 = vmatprep.subr.mxu0 0.0
    %1285 = vmatpush1.msra.mxu0 0.0
    %1286 = vmatprep.subr.mxu0 0.0
    %1287 = vmatpush1.msra.mxu0 0.0
    %1288 = vmatprep.subr.mxu0 0.0
    %1289 = vmatpush1.msra.mxu0 0.0
    %1290 = vmatprep.subr.mxu0 0.0
    %1291 = vmatpush1.msra.mxu0 0.0
    %1292 = vmatprep.subr.mxu0 0.0
    %1293 = vmatpush1.msra.mxu0 0.0
    %1294 = vmatprep.subr.mxu0 0.0
    %1295 = vmatpush1.msra.mxu0 0.0
    %1296 = vmatprep.subr.mxu0 0.0
    %1297 = vmatpush1.msra.mxu0 0.0
    %1298 = vmatprep.subr.mxu0 0.0
    %1299 = vmatpush1.msra.mxu0 0.0
    %1300 = vmatprep.subr.mxu0 0.0
    %1301 = vmatpush1.msra.mxu0 0.0
    %1302 = vmatprep.subr.mxu0 0.0
    %1303 = vmatpush1.msra.mxu0 0.0
    %1304 = vmatprep.subr.mxu0 0.0
    %1305 = vmatpush1.msra.mxu0 0.0
    %1306 = vmatprep.subr.mxu0 0.0
    %1307 = vmatpush1.msra.mxu0 0.0
    %1308 = vmatprep.subr.mxu0 0.0
    %1309 = vmatpush1.msra.mxu0 0.0
    %1310 = vmatprep.subr.mxu0 0.0
    %1311 = vmatpush1.msra.mxu0 0.0
    %1312 = vmatprep.subr.mxu0 0.0
    %1313 = vmatpush1.msra.mxu0 0.0
    %1314 = vmatprep.subr.mxu0 0.0
    %1315 = vmatpush1.msra.mxu0 0.0
    %1316 = vmatprep.subr.mxu0 0.0
    %1317 = vmatpush1.msra.mxu0 0.0
    %1318 = vmatprep.subr.mxu0 0.0
    %1319 = vmatpush1.msra.mxu0 0.0
    %1320 = vmatprep.mubr.f32.mxu0 0.0
    %1321 = vmatmul.mubr.f32.gmra.mrb[0].mxu0 %v1254
    %v1322 = vpop.f32.mrb[0].mxu0
    %v1323 = vadd.f32 %v1249, %v1322
    %v1324 = vpop.f32.mrb[0].mxu0
    %1325 = vdwg.mxu0
    %vm1326 = vcmask 1024
    %1327 = vst.msk [vmem:[%s21] sm:$0x3] %vm1326, %v1323
    // Predicated region
    $region106: #{r_critic_forward.1} parent=1 // pred_check
      _
    $region107: #{r_critic_forward.1} parent=1 // pred_check_branch
      %1329 = sbr.rel (0) target = $region109
    $region108: #{r_critic_forward.1} parent=1 // pred_region
      _
    $region109: #{r_critic_forward.1} parent=1 // pred_fallthru
      _
    // Predicated region
    $region110: #{r_critic_forward.1} parent=1 // pred_check
      _
    $region111: #{r_critic_forward.1} parent=1 // pred_check_branch
      %1331 = sbr.rel (0) target = $region113
    $region112: #{r_critic_forward.1} parent=1 // pred_region
      _
    $region113: #{r_critic_forward.1} parent=1 // pred_fallthru
      _
    // Predicated region
    $region114: #{r_critic_forward.1} parent=1 // pred_check
      _
    $region115: #{r_critic_forward.1} parent=1 // pred_check_branch
      %1333 = sbr.rel (0) target = $region117
    $region116: #{r_critic_forward.1} parent=1 // pred_region
      _
    $region117: #{r_critic_forward.1} parent=1 // pred_fallthru
      _
    // Predicated region
    $region118: #{r_critic_forward.1} parent=1 // pred_check
      _
    $region119: #{r_critic_forward.1} parent=1 // pred_check_branch
      %1335 = sbr.rel (0) target = $region121
    $region120: #{r_critic_forward.1} parent=1 // pred_region
      _
    $region121: #{r_critic_forward.1} parent=1 // pred_fallthru
      _
    %1336 = vsyncpa [#allocation4], 1
    %1337 = vsyncpa [#allocation6], 1
    %1338 = vsyncpa [#allocation9], 1

</llo_original>
